<compile_context>
chip_gen: v5e
topology: v5e:2x2
jax: 0.10.0
libtpu: 0.0.40
codegen_flags: <defaults>
</compile_context>

<pallas_src>
import jax
import jax.numpy as jnp
from jax import lax
from jax.experimental import pallas as pl
from jax.experimental.pallas import tpu as pltpu

# ---------------- model config (small, consistent with module __init__) ----------------
D_MODEL = 32
N_HEADS = 4
HEAD_DIM = D_MODEL // N_HEADS
D_FF = 64
EPS = 1e-5                           # nn.LayerNorm default
SCALE = float(D_MODEL) ** 0.5        # module scales by sqrt(d_model), NOT sqrt(head_dim)
INV_SCALE = 1.0 / SCALE
NEG_INF = -1e30                      # finite "minus infinity": avoids (-inf) - (-inf) NaNs

# row indices inside the packed (18, D_MODEL) bias / LayerNorm slab
(B_SA_Q, B_SA_K, B_SA_V, B_SA_O,
 B_CA_Q, B_CA_K, B_CA_V, B_CA_O,
 B_M1_B2, B_M2_B2,
 N1_G, N1_B, N2_G, N2_B, N3_G, N3_B, N4_G, N4_B) = range(18)

# TODO(synk): nn.Dropout layers are identity in eval / deterministic mode; not implemented.


# ---------------- in-kernel math helpers (trace into the Pallas kernel) ----------------
def _row(b_d, i):
    """Static (1, D) row slice of the packed bias slab; broadcasts over folded rows."""
    return b_d[i:i + 1, :]


def _layernorm(x, g, b):
    # two-pass (centered) variance: robust to non-zero-mean inputs
    mu = jnp.mean(x, axis=-1, keepdims=True)
    xc = x - mu
    var = jnp.mean(xc * xc, axis=-1, keepdims=True)
    return xc * lax.rsqrt(var + EPS) * g + b


def _split_heads(x3):
    """(bt, L, D) -> (H*bt, L, HEAD_DIM): heads stacked head-major on the leading axis."""
    return jnp.concatenate(
        [x3[:, :, h * HEAD_DIM:(h + 1) * HEAD_DIM] for h in range(N_HEADS)], axis=0)


def _merge_heads(ctx, bt):
    """(H*bt, L, HEAD_DIM) -> (bt, L, D): heads back onto the lane axis (feature order h*HD+d)."""
    return jnp.concatenate([ctx[h * bt:(h + 1) * bt] for h in range(N_HEADS)], axis=-1)


def _attention(q2, k2, v2, bias, bt, q_len, k_len, w_out_block, o_col, b_o):
    """q2: (bt*q_len, D) pre-scaled by 1/sqrt(d_model); k2/v2: (bt*k_len, D).

    bias: (q_len, k_len) additive mask bias (precomputed in the wrapper).
    w_out_block: 128-lane-aligned weight half-slab; the out-projection result lives at
    columns [o_col, o_col + D_MODEL).  All head math runs as batched matmuls over H*bt.
    """
    qh = _split_heads(q2.reshape(bt, q_len, D_MODEL))          # (HB, q_len, HD)
    kh = _split_heads(k2.reshape(bt, k_len, D_MODEL))          # (HB, k_len, HD)
    vh = _split_heads(v2.reshape(bt, k_len, D_MODEL))          # (HB, k_len, HD)

    e = jnp.einsum('bqd,bkd->bqk', qh, kh,
                   preferred_element_type=jnp.float32)         # (HB, q_len, k_len)
    e = e + bias[None, :, :]                                   # shared over batch & heads
    m = jnp.max(e, axis=-1, keepdims=True)
    p = jnp.exp(e - m)
    denom = jnp.sum(p, axis=-1, keepdims=True)                 # (HB, q_len, 1)

    ctx = jnp.einsum('bqk,bkd->bqd', p, vh,
                     preferred_element_type=jnp.float32)       # (HB, q_len, HD)
    ctx = ctx * jnp.reciprocal(denom)                          # deferred softmax normalization

    ctx2 = _merge_heads(ctx, bt).reshape(bt * q_len, D_MODEL)  # (bt*q_len, D)
    o = jnp.dot(ctx2, w_out_block, preferred_element_type=jnp.float32)  # 128-wide, aligned RHS
    return o[:, o_col:o_col + D_MODEL] + b_o


def _decoder_layer_math(x, enc, sbias, cbias, w_attn, w_ff1, w_ff2, b_d, b_ff):
    """Shared forward math. x: (bt, S, D), enc: (bt, T, D) -> (bt, S, D).

    sbias/cbias are additive mask biases (0 where attention allowed, -1e30 where masked).
    """
    bt, s, d = x.shape
    t = enc.shape[1]
    x2 = x.reshape(bt * s, d)        # fold batch into rows for all row-wise ops
    enc2 = enc.reshape(bt * t, d)

    # packed attention weights, split once at the 128-lane boundary (tile-aligned, free):
    # wa = [sa_q | sa_k | sa_v | ca_q],  wb = [ca_k | ca_v | sa_o | ca_o]
    wa = w_attn[:, :4 * d]
    wb = w_attn[:, 4 * d:]

    # ---- 1) self-attention (fused QKV projection) + residual, then norm1 (post-norm) ----
    qkv = jnp.dot(x2, wa, preferred_element_type=jnp.float32)          # (bt*S, 4D), col 3 unused
    q = (qkv[:, 0:d] + _row(b_d, B_SA_Q)) * INV_SCALE
    k = qkv[:, d:2 * d] + _row(b_d, B_SA_K)
    v = qkv[:, 2 * d:3 * d] + _row(b_d, B_SA_V)
    sa = _attention(q, k, v, sbias, bt, s, s, wb, 2 * d, _row(b_d, B_SA_O))
    x2 = _layernorm(x2 + sa, _row(b_d, N1_G), _row(b_d, N1_B))

    # ---- 2) mlp1 + residual, then norm2 ----
    h = jnp.maximum(jnp.dot(x2, w_ff1[0], preferred_element_type=jnp.float32) + b_ff[0:1, :], 0.0)
    y = jnp.dot(h, w_ff2[0], preferred_element_type=jnp.float32) + _row(b_d, B_M1_B2)
    x2 = _layernorm(x2 + y, _row(b_d, N2_G), _row(b_d, N2_B))

    # ---- 3) cross-attention (fused KV projection on encoder_out) + residual, then norm3 ----
    cq = jnp.dot(x2, wa, preferred_element_type=jnp.float32)           # need cols 3D:4D (ca_q)
    q = (cq[:, 3 * d:4 * d] + _row(b_d, B_CA_Q)) * INV_SCALE
    kv = jnp.dot(enc2, wb, preferred_element_type=jnp.float32)         # cols 0:2D = ca_k | ca_v
    k = kv[:, 0:d] + _row(b_d, B_CA_K)
    v = kv[:, d:2 * d] + _row(b_d, B_CA_V)
    ca = _attention(q, k, v, cbias, bt, s, t, wb, 3 * d, _row(b_d, B_CA_O))
    x2 = _layernorm(x2 + ca, _row(b_d, N3_G), _row(b_d, N3_B))

    # ---- 4) mlp2 + residual, then norm4 ----
    h = jnp.maximum(jnp.dot(x2, w_ff1[1], preferred_element_type=jnp.float32) + b_ff[1:2, :], 0.0)
    y = jnp.dot(h, w_ff2[1], preferred_element_type=jnp.float32) + _row(b_d, B_M2_B2)
    x2 = _layernorm(x2 + y, _row(b_d, N4_G), _row(b_d, N4_B))

    return x2.reshape(bt, s, d)


# ---------------- parameter bookkeeping (per-module params, then packed into slabs) ----------------
PARAM_ORDER = [
    "sa_q_w", "sa_q_b", "sa_k_w", "sa_k_b", "sa_v_w", "sa_v_b", "sa_o_w", "sa_o_b",
    "n1_g", "n1_b",
    "m1_w1", "m1_b1", "m1_w2", "m1_b2",
    "n2_g", "n2_b",
    "ca_q_w", "ca_q_b", "ca_k_w", "ca_k_b", "ca_v_w", "ca_v_b", "ca_o_w", "ca_o_b",
    "n3_g", "n3_b",
    "m2_w1", "m2_b1", "m2_w2", "m2_b2",
    "n4_g", "n4_b",
]

PARAM_SHAPES = {
    "sa_q_w": (D_MODEL, D_MODEL), "sa_q_b": (1, D_MODEL),
    "sa_k_w": (D_MODEL, D_MODEL), "sa_k_b": (1, D_MODEL),
    "sa_v_w": (D_MODEL, D_MODEL), "sa_v_b": (1, D_MODEL),
    "sa_o_w": (D_MODEL, D_MODEL), "sa_o_b": (1, D_MODEL),
    "n1_g": (1, D_MODEL), "n1_b": (1, D_MODEL),
    "m1_w1": (D_MODEL, D_FF), "m1_b1": (1, D_FF),
    "m1_w2": (D_FF, D_MODEL), "m1_b2": (1, D_MODEL),
    "n2_g": (1, D_MODEL), "n2_b": (1, D_MODEL),
    "ca_q_w": (D_MODEL, D_MODEL), "ca_q_b": (1, D_MODEL),
    "ca_k_w": (D_MODEL, D_MODEL), "ca_k_b": (1, D_MODEL),
    "ca_v_w": (D_MODEL, D_MODEL), "ca_v_b": (1, D_MODEL),
    "ca_o_w": (D_MODEL, D_MODEL), "ca_o_b": (1, D_MODEL),
    "n3_g": (1, D_MODEL), "n3_b": (1, D_MODEL),
    "m2_w1": (D_MODEL, D_FF), "m2_b1": (1, D_FF),
    "m2_w2": (D_FF, D_MODEL), "m2_b2": (1, D_MODEL),
    "n4_g": (1, D_MODEL), "n4_b": (1, D_MODEL),
}


def init_params(key):
    params = {}
    keys = jax.random.split(key, len(PARAM_ORDER))
    for k, name in zip(keys, PARAM_ORDER):
        shape = PARAM_SHAPES[name]
        if name.endswith("_g"):      # layernorm gamma ~ 1 (+ noise so it isn't a no-op)
            params[name] = (1.0 + 0.1 * jax.random.normal(k, shape)).astype(jnp.float32)
        elif name.endswith("_b") and name[:2] in ("n1", "n2", "n3", "n4"):
            params[name] = (0.1 * jax.random.normal(k, shape)).astype(jnp.float32)
        else:
            fan_in = shape[0] if shape[0] > 1 else shape[1]
            scale = 1.0 / (fan_in ** 0.5)
            params[name] = (scale * jax.random.normal(k, shape)).astype(jnp.float32)
    return params


def pack_params(p):
    """Pack the 32 module parameters into 5 lane-dense slabs (done once at init).

    Attention slab column layout (two 128-lane-aligned halves):
        [ sa_q | sa_k | sa_v | ca_q ][ ca_k | ca_v | sa_o | ca_o ]
    so every matmul's weight operand is an aligned 128-wide half-slab.
    """
    w_attn = jnp.concatenate(
        [p["sa_q_w"], p["sa_k_w"], p["sa_v_w"], p["ca_q_w"],
         p["ca_k_w"], p["ca_v_w"], p["sa_o_w"], p["ca_o_w"]], axis=1)          # (D, 8D)
    w_ff1 = jnp.stack([p["m1_w1"], p["m2_w1"]], axis=0)                        # (2, D, D_FF)
    w_ff2 = jnp.stack([p["m1_w2"], p["m2_w2"]], axis=0)                        # (2, D_FF, D)
    b_d = jnp.concatenate(
        [p["sa_q_b"], p["sa_k_b"], p["sa_v_b"], p["sa_o_b"],
         p["ca_q_b"], p["ca_k_b"], p["ca_v_b"], p["ca_o_b"],
         p["m1_b2"], p["m2_b2"],
         p["n1_g"], p["n1_b"], p["n2_g"], p["n2_b"],
         p["n3_g"], p["n3_b"], p["n4_g"], p["n4_b"]], axis=0)                  # (18, D)
    b_ff = jnp.concatenate([p["m1_b1"], p["m2_b1"]], axis=0)                   # (2, D_FF)
    return w_attn, w_ff1, w_ff2, b_d, b_ff


# ---------------- Pallas kernel ----------------
def decoder_layer_kernel(enc_ref, tgt_ref, sbias_ref, cbias_ref,
                         w_attn_ref, w_ff1_ref, w_ff2_ref, b_d_ref, b_ff_ref,
                         out_ref):
    out = _decoder_layer_math(
        tgt_ref[...], enc_ref[...], sbias_ref[...], cbias_ref[...],
        w_attn_ref[...], w_ff1_ref[...], w_ff2_ref[...], b_d_ref[...], b_ff_ref[...])
    out_ref[...] = out.astype(out_ref.dtype)


def transformer_decoder_layer(encoder_out, tgt, self_attn_mask, cross_attn_mask, packed,
                              *, batch_block=None):
    B, S, D = tgt.shape
    T = encoder_out.shape[1]
    w_attn, w_ff1, w_ff2, b_d, b_ff = packed

    # mask -> additive bias conversion is pure wrapper-side prep (runs once in XLA, not per step)
    sbias = jnp.where(self_attn_mask == 1.0, NEG_INF, 0.0).astype(jnp.float32)   # (S, S)
    cbias = jnp.where(cross_attn_mask == 1.0, NEG_INF, 0.0).astype(jnp.float32)  # (S, T)

    # Default: one grid step over the whole batch (best on single-TC v5e/v6e, where the
    # ~0.35us per-step overhead + weight re-fetch dominate this tiny workload).  On v7x
    # (2 TensorCores), pass batch_block=B//2 only once B is large enough that per-core
    # compute exceeds the fixed per-step costs.
    if batch_block is None:
        batch_block = B
    assert B % batch_block == 0
    nb = B // batch_block

    in_specs = [
        pl.BlockSpec((batch_block, T, D), lambda g: (g, 0, 0)),   # encoder_out tile
        pl.BlockSpec((batch_block, S, D), lambda g: (g, 0, 0)),   # tgt tile
        pl.BlockSpec((S, S), lambda g: (0, 0)),                   # self-attn additive bias
        pl.BlockSpec((S, T), lambda g: (0, 0)),                   # cross-attn additive bias
        pl.BlockSpec(w_attn.shape, lambda g: (0, 0)),             # packed attention weights
        pl.BlockSpec(w_ff1.shape, lambda g: (0, 0, 0)),           # stacked MLP first layers
        pl.BlockSpec(w_ff2.shape, lambda g: (0, 0, 0)),           # stacked MLP second layers
        pl.BlockSpec(b_d.shape, lambda g: (0, 0)),                # d_model-wide bias / LN rows
        pl.BlockSpec(b_ff.shape, lambda g: (0, 0)),               # d_ff-wide bias rows
    ]

    return pl.pallas_call(
        decoder_layer_kernel,
        out_shape=jax.ShapeDtypeStruct((B, S, D), jnp.float32),
        grid_spec=pltpu.PrefetchScalarGridSpec(
            num_scalar_prefetch=0,
            grid=(nb,),
            in_specs=in_specs,
            out_specs=pl.BlockSpec((batch_block, S, D), lambda g: (g, 0, 0)),
        ),
        compiler_params=pltpu.CompilerParams(dimension_semantics=("parallel",)),
    )(encoder_out, tgt, sbias, cbias, w_attn, w_ff1, w_ff2, b_d, b_ff)


# ---------------- pure-JAX reference for validation ----------------
def reference(encoder_out, tgt, smask, cmask, packed):
    sbias = jnp.where(smask == 1.0, NEG_INF, 0.0).astype(jnp.float32)
    cbias = jnp.where(cmask == 1.0, NEG_INF, 0.0).astype(jnp.float32)
    return _decoder_layer_math(tgt, encoder_out, sbias, cbias, *packed)


if __name__ == "__main__":
    key = jax.random.PRNGKey(0)
    k_p, k_enc, k_tgt = jax.random.split(key, 3)

    B, S, T = 2, 8, 16  # batch, tgt seq len, encoder seq len
    params = init_params(k_p)
    packed = pack_params(params)
    encoder_out = jax.random.normal(k_enc, (B, T, D_MODEL), dtype=jnp.float32)
    tgt = jax.random.normal(k_tgt, (B, S, D_MODEL), dtype=jnp.float32)

    # masks: 1 == masked (attention disallowed), matching the PyTorch module
    self_attn_mask = jnp.triu(jnp.ones((S, S), dtype=jnp.float32), k=1)  # causal
    cross_attn_mask = jnp.zeros((S, T), dtype=jnp.float32)               # no masking

    out = transformer_decoder_layer(encoder_out, tgt, self_attn_mask, cross_attn_mask, packed)
    out = jax.block_until_ready(out)

    ref = jax.block_until_ready(
        reference(encoder_out, tgt, self_attn_mask, cross_attn_mask, packed))
    assert out.shape == (B, S, D_MODEL)
    assert jnp.allclose(out, ref, atol=1e-4, rtol=1e-4), (
        f"max abs diff {jnp.max(jnp.abs(out - ref))}")

    print("KERNEL_OK")
</pallas_src>

<mosaic_0001>
module attributes {stable_mosaic.version = 11 : i64} {
  func.func @decoder_layer_kernel(%arg0: i32, %arg1: memref<2x16x32xf32, #tpu.memory_space<vmem>>, %arg2: memref<2x8x32xf32, #tpu.memory_space<vmem>>, %arg3: memref<8x8xf32, #tpu.memory_space<vmem>>, %arg4: memref<8x16xf32, #tpu.memory_space<vmem>>, %arg5: memref<32x256xf32, #tpu.memory_space<vmem>>, %arg6: memref<2x32x64xf32, #tpu.memory_space<vmem>>, %arg7: memref<2x64x32xf32, #tpu.memory_space<vmem>>, %arg8: memref<18x32xf32, #tpu.memory_space<vmem>>, %arg9: memref<2x64xf32, #tpu.memory_space<vmem>>, %arg10: memref<2x8x32xf32, #tpu.memory_space<vmem>>) attributes {dimension_semantics = [#tpu.dimension_semantics<parallel>], iteration_bounds = array<i64: 1>, scalar_prefetch = 0 : i64, scratch_operands = 0 : i64, tpu.core_type = #tpu.core_type<tc>, window_params = [{transform_indices = @transform_0, window_bounds = array<i64: 2, 16, 32>}, {transform_indices = @transform_1, window_bounds = array<i64: 2, 8, 32>}, {pipeline_mode = #tpu.pipeline_mode<synchronous>, transform_indices = @transform_2, window_bounds = array<i64: 8, 8>}, {pipeline_mode = #tpu.pipeline_mode<synchronous>, transform_indices = @transform_3, window_bounds = array<i64: 8, 16>}, {pipeline_mode = #tpu.pipeline_mode<synchronous>, transform_indices = @transform_4, window_bounds = array<i64: 32, 256>}, {pipeline_mode = #tpu.pipeline_mode<synchronous>, transform_indices = @transform_5, window_bounds = array<i64: 2, 32, 64>}, {pipeline_mode = #tpu.pipeline_mode<synchronous>, transform_indices = @transform_6, window_bounds = array<i64: 2, 64, 32>}, {pipeline_mode = #tpu.pipeline_mode<synchronous>, transform_indices = @transform_7, window_bounds = array<i64: 18, 32>}, {pipeline_mode = #tpu.pipeline_mode<synchronous>, transform_indices = @transform_8, window_bounds = array<i64: 2, 64>}, {transform_indices = @transform_9, window_bounds = array<i64: 2, 8, 32>}]} {
    %c0 = arith.constant 0 : index
    %c0_0 = arith.constant 0 : index
    %c0_1 = arith.constant 0 : index
    %0 = vector.load %arg2[%c0, %c0_0, %c0_1] : memref<2x8x32xf32, #tpu.memory_space<vmem>>, vector<2x8x32xf32>
    %c0_2 = arith.constant 0 : index
    %c0_3 = arith.constant 0 : index
    %c0_4 = arith.constant 0 : index
    %1 = vector.load %arg1[%c0_2, %c0_3, %c0_4] : memref<2x16x32xf32, #tpu.memory_space<vmem>>, vector<2x16x32xf32>
    %c0_5 = arith.constant 0 : index
    %c0_6 = arith.constant 0 : index
    %2 = vector.load %arg3[%c0_5, %c0_6] : memref<8x8xf32, #tpu.memory_space<vmem>>, vector<8x8xf32>
    %c0_7 = arith.constant 0 : index
    %c0_8 = arith.constant 0 : index
    %3 = vector.load %arg4[%c0_7, %c0_8] : memref<8x16xf32, #tpu.memory_space<vmem>>, vector<8x16xf32>
    %c0_9 = arith.constant 0 : index
    %c0_10 = arith.constant 0 : index
    %4 = vector.load %arg5[%c0_9, %c0_10] : memref<32x256xf32, #tpu.memory_space<vmem>>, vector<32x256xf32>
    %c0_11 = arith.constant 0 : index
    %c0_12 = arith.constant 0 : index
    %c0_13 = arith.constant 0 : index
    %5 = vector.load %arg6[%c0_11, %c0_12, %c0_13] : memref<2x32x64xf32, #tpu.memory_space<vmem>>, vector<2x32x64xf32>
    %c0_14 = arith.constant 0 : index
    %c0_15 = arith.constant 0 : index
    %c0_16 = arith.constant 0 : index
    %6 = vector.load %arg7[%c0_14, %c0_15, %c0_16] : memref<2x64x32xf32, #tpu.memory_space<vmem>>, vector<2x64x32xf32>
    %c0_17 = arith.constant 0 : index
    %c0_18 = arith.constant 0 : index
    %7 = vector.load %arg8[%c0_17, %c0_18] : memref<18x32xf32, #tpu.memory_space<vmem>>, vector<18x32xf32>
    %c0_19 = arith.constant 0 : index
    %c0_20 = arith.constant 0 : index
    %8 = vector.load %arg9[%c0_19, %c0_20] : memref<2x64xf32, #tpu.memory_space<vmem>>, vector<2x64xf32>
    %9 = vector.shape_cast %0 : vector<2x8x32xf32> to vector<16x32xf32>
    %10 = vector.shape_cast %1 : vector<2x16x32xf32> to vector<32x32xf32>
    %11 = vector.extract_strided_slice %4 {offsets = [0, 0], sizes = [32, 128], strides = [1, 1]} : vector<32x256xf32> to vector<32x128xf32>
    %12 = vector.extract_strided_slice %4 {offsets = [0, 128], sizes = [32, 128], strides = [1, 1]} : vector<32x256xf32> to vector<32x128xf32>
    %cst = arith.constant dense<0.000000e+00> : vector<16x128xf32>
    %13 = tpu.matmul %9, %11, %cst {dimension_numbers = #tpu.dot_dimension_numbers<[1], [0], [0], [1], [0, 0, 1, 1], [], []>} : vector<16x32xf32>, vector<32x128xf32>, vector<16x128xf32> -> vector<16x128xf32>
    %14 = vector.extract_strided_slice %13 {offsets = [0, 0], sizes = [16, 32], strides = [1, 1]} : vector<16x128xf32> to vector<16x32xf32>
    %15 = vector.extract_strided_slice %7 {offsets = [0, 0], sizes = [1, 32], strides = [1, 1]} : vector<18x32xf32> to vector<1x32xf32>
    %16 = vector.broadcast %15 : vector<1x32xf32> to vector<16x32xf32>
    %17 = arith.addf %14, %16 : vector<16x32xf32>
    %cst_21 = arith.constant 0.176776692 : f32
    %18 = vector.broadcast %cst_21 : f32 to vector<16x32xf32>
    %19 = arith.mulf %17, %18 : vector<16x32xf32>
    %20 = vector.extract_strided_slice %13 {offsets = [0, 32], sizes = [16, 32], strides = [1, 1]} : vector<16x128xf32> to vector<16x32xf32>
    %21 = vector.extract_strided_slice %7 {offsets = [1, 0], sizes = [1, 32], strides = [1, 1]} : vector<18x32xf32> to vector<1x32xf32>
    %22 = vector.broadcast %21 : vector<1x32xf32> to vector<16x32xf32>
    %23 = arith.addf %20, %22 : vector<16x32xf32>
    %24 = vector.extract_strided_slice %13 {offsets = [0, 64], sizes = [16, 32], strides = [1, 1]} : vector<16x128xf32> to vector<16x32xf32>
    %25 = vector.extract_strided_slice %7 {offsets = [2, 0], sizes = [1, 32], strides = [1, 1]} : vector<18x32xf32> to vector<1x32xf32>
    %26 = vector.broadcast %25 : vector<1x32xf32> to vector<16x32xf32>
    %27 = arith.addf %24, %26 : vector<16x32xf32>
    %28 = vector.extract_strided_slice %7 {offsets = [3, 0], sizes = [1, 32], strides = [1, 1]} : vector<18x32xf32> to vector<1x32xf32>
    %29 = vector.shape_cast %19 : vector<16x32xf32> to vector<2x8x32xf32>
    %30 = vector.extract_strided_slice %29 {offsets = [0, 0, 0], sizes = [2, 8, 8], strides = [1, 1, 1]} : vector<2x8x32xf32> to vector<2x8x8xf32>
    %31 = vector.extract_strided_slice %29 {offsets = [0, 0, 8], sizes = [2, 8, 8], strides = [1, 1, 1]} : vector<2x8x32xf32> to vector<2x8x8xf32>
    %32 = vector.extract_strided_slice %29 {offsets = [0, 0, 16], sizes = [2, 8, 8], strides = [1, 1, 1]} : vector<2x8x32xf32> to vector<2x8x8xf32>
    %33 = vector.extract_strided_slice %29 {offsets = [0, 0, 24], sizes = [2, 8, 8], strides = [1, 1, 1]} : vector<2x8x32xf32> to vector<2x8x8xf32>
    %34 = tpu.concatenate %30, %31, %32, %33 in 0 : vector<2x8x8xf32>, vector<2x8x8xf32>, vector<2x8x8xf32>, vector<2x8x8xf32> -> vector<8x8x8xf32>
    %35 = vector.shape_cast %23 : vector<16x32xf32> to vector<2x8x32xf32>
    %36 = vector.extract_strided_slice %35 {offsets = [0, 0, 0], sizes = [2, 8, 8], strides = [1, 1, 1]} : vector<2x8x32xf32> to vector<2x8x8xf32>
    %37 = vector.extract_strided_slice %35 {offsets = [0, 0, 8], sizes = [2, 8, 8], strides = [1, 1, 1]} : vector<2x8x32xf32> to vector<2x8x8xf32>
    %38 = vector.extract_strided_slice %35 {offsets = [0, 0, 16], sizes = [2, 8, 8], strides = [1, 1, 1]} : vector<2x8x32xf32> to vector<2x8x8xf32>
    %39 = vector.extract_strided_slice %35 {offsets = [0, 0, 24], sizes = [2, 8, 8], strides = [1, 1, 1]} : vector<2x8x32xf32> to vector<2x8x8xf32>
    %40 = tpu.concatenate %36, %37, %38, %39 in 0 : vector<2x8x8xf32>, vector<2x8x8xf32>, vector<2x8x8xf32>, vector<2x8x8xf32> -> vector<8x8x8xf32>
    %41 = vector.shape_cast %27 : vector<16x32xf32> to vector<2x8x32xf32>
    %42 = vector.extract_strided_slice %41 {offsets = [0, 0, 0], sizes = [2, 8, 8], strides = [1, 1, 1]} : vector<2x8x32xf32> to vector<2x8x8xf32>
    %43 = vector.extract_strided_slice %41 {offsets = [0, 0, 8], sizes = [2, 8, 8], strides = [1, 1, 1]} : vector<2x8x32xf32> to vector<2x8x8xf32>
    %44 = vector.extract_strided_slice %41 {offsets = [0, 0, 16], sizes = [2, 8, 8], strides = [1, 1, 1]} : vector<2x8x32xf32> to vector<2x8x8xf32>
    %45 = vector.extract_strided_slice %41 {offsets = [0, 0, 24], sizes = [2, 8, 8], strides = [1, 1, 1]} : vector<2x8x32xf32> to vector<2x8x8xf32>
    %46 = tpu.concatenate %42, %43, %44, %45 in 0 : vector<2x8x8xf32>, vector<2x8x8xf32>, vector<2x8x8xf32>, vector<2x8x8xf32> -> vector<8x8x8xf32>
    "tpu.trace_start"() <{level = 10 : i32, message = "bqd,bkd->bqk"}> : () -> ()
    %cst_22 = arith.constant dense<0.000000e+00> : vector<8x8x8xf32>
    %47 = tpu.matmul %34, %40, %cst_22 {dimension_numbers = #tpu.dot_dimension_numbers<[2], [2], [1], [1], [0, 0, 0, 1, 1, 1], [0], [0]>} : vector<8x8x8xf32>, vector<8x8x8xf32>, vector<8x8x8xf32> -> vector<8x8x8xf32>
    "tpu.trace_stop"() : () -> ()
    %48 = vector.shape_cast %2 : vector<8x8xf32> to vector<1x8x8xf32>
    %49 = vector.broadcast %48 : vector<1x8x8xf32> to vector<8x8x8xf32>
    %50 = arith.addf %47, %49 : vector<8x8x8xf32>
    %cst_23 = arith.constant dense<0xFF800000> : vector<8x8xf32>
    %51 = vector.multi_reduction <maximumf>, %50, %cst_23 [2] : vector<8x8x8xf32> to vector<8x8xf32>
    %52 = vector.shape_cast %51 : vector<8x8xf32> to vector<8x8x1xf32>
    %53 = vector.broadcast %52 : vector<8x8x1xf32> to vector<8x8x8xf32>
    %54 = arith.subf %50, %53 : vector<8x8x8xf32>
    %55 = math.exp %54 : vector<8x8x8xf32>
    %cst_24 = arith.constant dense<0.000000e+00> : vector<8x8xf32>
    %56 = vector.multi_reduction <add>, %55, %cst_24 [2] : vector<8x8x8xf32> to vector<8x8xf32>
    %57 = vector.shape_cast %56 : vector<8x8xf32> to vector<8x8x1xf32>
    "tpu.trace_start"() <{level = 10 : i32, message = "bqk,bkd->bqd"}> : () -> ()
    %cst_25 = arith.constant dense<0.000000e+00> : vector<8x8x8xf32>
    %58 = tpu.matmul %55, %46, %cst_25 {dimension_numbers = #tpu.dot_dimension_numbers<[2], [1], [1], [2], [0, 0, 0, 1, 1, 2], [0], [0]>} : vector<8x8x8xf32>, vector<8x8x8xf32>, vector<8x8x8xf32> -> vector<8x8x8xf32>
    "tpu.trace_stop"() : () -> ()
    %cst_26 = arith.constant 1.000000e+00 : f32
    %59 = vector.broadcast %cst_26 : f32 to vector<8x8x1xf32>
    %60 = arith.divf %59, %57 : vector<8x8x1xf32>
    %61 = vector.broadcast %60 : vector<8x8x1xf32> to vector<8x8x8xf32>
    %62 = arith.mulf %58, %61 : vector<8x8x8xf32>
    %63 = vector.extract_strided_slice %62 {offsets = [0, 0, 0], sizes = [2, 8, 8], strides = [1, 1, 1]} : vector<8x8x8xf32> to vector<2x8x8xf32>
    %64 = vector.extract_strided_slice %62 {offsets = [2, 0, 0], sizes = [2, 8, 8], strides = [1, 1, 1]} : vector<8x8x8xf32> to vector<2x8x8xf32>
    %65 = vector.extract_strided_slice %62 {offsets = [4, 0, 0], sizes = [2, 8, 8], strides = [1, 1, 1]} : vector<8x8x8xf32> to vector<2x8x8xf32>
    %66 = vector.extract_strided_slice %62 {offsets = [6, 0, 0], sizes = [2, 8, 8], strides = [1, 1, 1]} : vector<8x8x8xf32> to vector<2x8x8xf32>
    %67 = tpu.concatenate %63, %64, %65, %66 in 2 : vector<2x8x8xf32>, vector<2x8x8xf32>, vector<2x8x8xf32>, vector<2x8x8xf32> -> vector<2x8x32xf32>
    %68 = vector.shape_cast %67 : vector<2x8x32xf32> to vector<16x32xf32>
    %cst_27 = arith.constant dense<0.000000e+00> : vector<16x128xf32>
    %69 = tpu.matmul %68, %12, %cst_27 {dimension_numbers = #tpu.dot_dimension_numbers<[1], [0], [0], [1], [0, 0, 1, 1], [], []>} : vector<16x32xf32>, vector<32x128xf32>, vector<16x128xf32> -> vector<16x128xf32>
    %70 = vector.extract_strided_slice %69 {offsets = [0, 64], sizes = [16, 32], strides = [1, 1]} : vector<16x128xf32> to vector<16x32xf32>
    %71 = vector.broadcast %28 : vector<1x32xf32> to vector<16x32xf32>
    %72 = arith.addf %70, %71 : vector<16x32xf32>
    %73 = arith.addf %9, %72 : vector<16x32xf32>
    %74 = vector.extract_strided_slice %7 {offsets = [10, 0], sizes = [1, 32], strides = [1, 1]} : vector<18x32xf32> to vector<1x32xf32>
    %75 = vector.extract_strided_slice %7 {offsets = [11, 0], sizes = [1, 32], strides = [1, 1]} : vector<18x32xf32> to vector<1x32xf32>
    %cst_28 = arith.constant dense<0.000000e+00> : vector<16xf32>
    %76 = vector.multi_reduction <add>, %73, %cst_28 [1] : vector<16x32xf32> to vector<16xf32>
    %77 = vector.shape_cast %76 : vector<16xf32> to vector<16x1xf32>
    %cst_29 = arith.constant 3.200000e+01 : f32
    %78 = vector.broadcast %cst_29 : f32 to vector<16x1xf32>
    %79 = arith.divf %77, %78 : vector<16x1xf32>
    %80 = vector.broadcast %79 : vector<16x1xf32> to vector<16x32xf32>
    %81 = arith.subf %73, %80 : vector<16x32xf32>
    %82 = arith.mulf %81, %81 : vector<16x32xf32>
    %cst_30 = arith.constant dense<0.000000e+00> : vector<16xf32>
    %83 = vector.multi_reduction <add>, %82, %cst_30 [1] : vector<16x32xf32> to vector<16xf32>
    %84 = vector.shape_cast %83 : vector<16xf32> to vector<16x1xf32>
    %cst_31 = arith.constant 3.200000e+01 : f32
    %85 = vector.broadcast %cst_31 : f32 to vector<16x1xf32>
    %86 = arith.divf %84, %85 : vector<16x1xf32>
    %cst_32 = arith.constant 9.99999974E-6 : f32
    %87 = vector.broadcast %cst_32 : f32 to vector<16x1xf32>
    %88 = arith.addf %86, %87 : vector<16x1xf32>
    %89 = math.rsqrt %88 : vector<16x1xf32>
    %90 = vector.broadcast %89 : vector<16x1xf32> to vector<16x32xf32>
    %91 = arith.mulf %81, %90 : vector<16x32xf32>
    %92 = vector.broadcast %74 : vector<1x32xf32> to vector<16x32xf32>
    %93 = arith.mulf %91, %92 : vector<16x32xf32>
    %94 = vector.broadcast %75 : vector<1x32xf32> to vector<16x32xf32>
    %95 = arith.addf %93, %94 : vector<16x32xf32>
    %96 = vector.extract_strided_slice %5 {offsets = [0, 0, 0], sizes = [1, 32, 64], strides = [1, 1, 1]} : vector<2x32x64xf32> to vector<1x32x64xf32>
    %97 = vector.shape_cast %96 : vector<1x32x64xf32> to vector<32x64xf32>
    %cst_33 = arith.constant dense<0.000000e+00> : vector<16x64xf32>
    %98 = tpu.matmul %95, %97, %cst_33 {dimension_numbers = #tpu.dot_dimension_numbers<[1], [0], [0], [1], [0, 0, 1, 1], [], []>} : vector<16x32xf32>, vector<32x64xf32>, vector<16x64xf32> -> vector<16x64xf32>
    %99 = vector.extract_strided_slice %8 {offsets = [0, 0], sizes = [1, 64], strides = [1, 1]} : vector<2x64xf32> to vector<1x64xf32>
    %100 = vector.broadcast %99 : vector<1x64xf32> to vector<16x64xf32>
    %101 = arith.addf %98, %100 : vector<16x64xf32>
    %cst_34 = arith.constant 0.000000e+00 : f32
    %102 = vector.broadcast %cst_34 : f32 to vector<16x64xf32>
    %103 = arith.maximumf %101, %102 : vector<16x64xf32>
    %104 = vector.extract_strided_slice %6 {offsets = [0, 0, 0], sizes = [1, 64, 32], strides = [1, 1, 1]} : vector<2x64x32xf32> to vector<1x64x32xf32>
    %105 = vector.shape_cast %104 : vector<1x64x32xf32> to vector<64x32xf32>
    %cst_35 = arith.constant dense<0.000000e+00> : vector<16x32xf32>
    %106 = tpu.matmul %103, %105, %cst_35 {dimension_numbers = #tpu.dot_dimension_numbers<[1], [0], [0], [1], [0, 0, 1, 1], [], []>} : vector<16x64xf32>, vector<64x32xf32>, vector<16x32xf32> -> vector<16x32xf32>
    %107 = vector.extract_strided_slice %7 {offsets = [8, 0], sizes = [1, 32], strides = [1, 1]} : vector<18x32xf32> to vector<1x32xf32>
    %108 = vector.broadcast %107 : vector<1x32xf32> to vector<16x32xf32>
    %109 = arith.addf %106, %108 : vector<16x32xf32>
    %110 = arith.addf %95, %109 : vector<16x32xf32>
    %111 = vector.extract_strided_slice %7 {offsets = [12, 0], sizes = [1, 32], strides = [1, 1]} : vector<18x32xf32> to vector<1x32xf32>
    %112 = vector.extract_strided_slice %7 {offsets = [13, 0], sizes = [1, 32], strides = [1, 1]} : vector<18x32xf32> to vector<1x32xf32>
    %cst_36 = arith.constant dense<0.000000e+00> : vector<16xf32>
    %113 = vector.multi_reduction <add>, %110, %cst_36 [1] : vector<16x32xf32> to vector<16xf32>
    %114 = vector.shape_cast %113 : vector<16xf32> to vector<16x1xf32>
    %cst_37 = arith.constant 3.200000e+01 : f32
    %115 = vector.broadcast %cst_37 : f32 to vector<16x1xf32>
    %116 = arith.divf %114, %115 : vector<16x1xf32>
    %117 = vector.broadcast %116 : vector<16x1xf32> to vector<16x32xf32>
    %118 = arith.subf %110, %117 : vector<16x32xf32>
    %119 = arith.mulf %118, %118 : vector<16x32xf32>
    %cst_38 = arith.constant dense<0.000000e+00> : vector<16xf32>
    %120 = vector.multi_reduction <add>, %119, %cst_38 [1] : vector<16x32xf32> to vector<16xf32>
    %121 = vector.shape_cast %120 : vector<16xf32> to vector<16x1xf32>
    %cst_39 = arith.constant 3.200000e+01 : f32
    %122 = vector.broadcast %cst_39 : f32 to vector<16x1xf32>
    %123 = arith.divf %121, %122 : vector<16x1xf32>
    %cst_40 = arith.constant 9.99999974E-6 : f32
    %124 = vector.broadcast %cst_40 : f32 to vector<16x1xf32>
    %125 = arith.addf %123, %124 : vector<16x1xf32>
    %126 = math.rsqrt %125 : vector<16x1xf32>
    %127 = vector.broadcast %126 : vector<16x1xf32> to vector<16x32xf32>
    %128 = arith.mulf %118, %127 : vector<16x32xf32>
    %129 = vector.broadcast %111 : vector<1x32xf32> to vector<16x32xf32>
    %130 = arith.mulf %128, %129 : vector<16x32xf32>
    %131 = vector.broadcast %112 : vector<1x32xf32> to vector<16x32xf32>
    %132 = arith.addf %130, %131 : vector<16x32xf32>
    %cst_41 = arith.constant dense<0.000000e+00> : vector<16x128xf32>
    %133 = tpu.matmul %132, %11, %cst_41 {dimension_numbers = #tpu.dot_dimension_numbers<[1], [0], [0], [1], [0, 0, 1, 1], [], []>} : vector<16x32xf32>, vector<32x128xf32>, vector<16x128xf32> -> vector<16x128xf32>
    %134 = vector.extract_strided_slice %133 {offsets = [0, 96], sizes = [16, 32], strides = [1, 1]} : vector<16x128xf32> to vector<16x32xf32>
    %135 = vector.extract_strided_slice %7 {offsets = [4, 0], sizes = [1, 32], strides = [1, 1]} : vector<18x32xf32> to vector<1x32xf32>
    %136 = vector.broadcast %135 : vector<1x32xf32> to vector<16x32xf32>
    %137 = arith.addf %134, %136 : vector<16x32xf32>
    %cst_42 = arith.constant 0.176776692 : f32
    %138 = vector.broadcast %cst_42 : f32 to vector<16x32xf32>
    %139 = arith.mulf %137, %138 : vector<16x32xf32>
    %cst_43 = arith.constant dense<0.000000e+00> : vector<32x128xf32>
    %140 = tpu.matmul %10, %12, %cst_43 {dimension_numbers = #tpu.dot_dimension_numbers<[1], [0], [0], [1], [0, 0, 1, 1], [], []>} : vector<32x32xf32>, vector<32x128xf32>, vector<32x128xf32> -> vector<32x128xf32>
    %141 = vector.extract_strided_slice %140 {offsets = [0, 0], sizes = [32, 32], strides = [1, 1]} : vector<32x128xf32> to vector<32x32xf32>
    %142 = vector.extract_strided_slice %7 {offsets = [5, 0], sizes = [1, 32], strides = [1, 1]} : vector<18x32xf32> to vector<1x32xf32>
    %143 = vector.broadcast %142 : vector<1x32xf32> to vector<32x32xf32>
    %144 = arith.addf %141, %143 : vector<32x32xf32>
    %145 = vector.extract_strided_slice %140 {offsets = [0, 32], sizes = [32, 32], strides = [1, 1]} : vector<32x128xf32> to vector<32x32xf32>
    %146 = vector.extract_strided_slice %7 {offsets = [6, 0], sizes = [1, 32], strides = [1, 1]} : vector<18x32xf32> to vector<1x32xf32>
    %147 = vector.broadcast %146 : vector<1x32xf32> to vector<32x32xf32>
    %148 = arith.addf %145, %147 : vector<32x32xf32>
    %149 = vector.extract_strided_slice %7 {offsets = [7, 0], sizes = [1, 32], strides = [1, 1]} : vector<18x32xf32> to vector<1x32xf32>
    %150 = vector.shape_cast %139 : vector<16x32xf32> to vector<2x8x32xf32>
    %151 = vector.extract_strided_slice %150 {offsets = [0, 0, 0], sizes = [2, 8, 8], strides = [1, 1, 1]} : vector<2x8x32xf32> to vector<2x8x8xf32>
    %152 = vector.extract_strided_slice %150 {offsets = [0, 0, 8], sizes = [2, 8, 8], strides = [1, 1, 1]} : vector<2x8x32xf32> to vector<2x8x8xf32>
    %153 = vector.extract_strided_slice %150 {offsets = [0, 0, 16], sizes = [2, 8, 8], strides = [1, 1, 1]} : vector<2x8x32xf32> to vector<2x8x8xf32>
    %154 = vector.extract_strided_slice %150 {offsets = [0, 0, 24], sizes = [2, 8, 8], strides = [1, 1, 1]} : vector<2x8x32xf32> to vector<2x8x8xf32>
    %155 = tpu.concatenate %151, %152, %153, %154 in 0 : vector<2x8x8xf32>, vector<2x8x8xf32>, vector<2x8x8xf32>, vector<2x8x8xf32> -> vector<8x8x8xf32>
    %156 = vector.shape_cast %144 : vector<32x32xf32> to vector<2x16x32xf32>
    %157 = vector.extract_strided_slice %156 {offsets = [0, 0, 0], sizes = [2, 16, 8], strides = [1, 1, 1]} : vector<2x16x32xf32> to vector<2x16x8xf32>
    %158 = vector.extract_strided_slice %156 {offsets = [0, 0, 8], sizes = [2, 16, 8], strides = [1, 1, 1]} : vector<2x16x32xf32> to vector<2x16x8xf32>
    %159 = vector.extract_strided_slice %156 {offsets = [0, 0, 16], sizes = [2, 16, 8], strides = [1, 1, 1]} : vector<2x16x32xf32> to vector<2x16x8xf32>
    %160 = vector.extract_strided_slice %156 {offsets = [0, 0, 24], sizes = [2, 16, 8], strides = [1, 1, 1]} : vector<2x16x32xf32> to vector<2x16x8xf32>
    %161 = tpu.concatenate %157, %158, %159, %160 in 0 : vector<2x16x8xf32>, vector<2x16x8xf32>, vector<2x16x8xf32>, vector<2x16x8xf32> -> vector<8x16x8xf32>
    %162 = vector.shape_cast %148 : vector<32x32xf32> to vector<2x16x32xf32>
    %163 = vector.extract_strided_slice %162 {offsets = [0, 0, 0], sizes = [2, 16, 8], strides = [1, 1, 1]} : vector<2x16x32xf32> to vector<2x16x8xf32>
    %164 = vector.extract_strided_slice %162 {offsets = [0, 0, 8], sizes = [2, 16, 8], strides = [1, 1, 1]} : vector<2x16x32xf32> to vector<2x16x8xf32>
    %165 = vector.extract_strided_slice %162 {offsets = [0, 0, 16], sizes = [2, 16, 8], strides = [1, 1, 1]} : vector<2x16x32xf32> to vector<2x16x8xf32>
    %166 = vector.extract_strided_slice %162 {offsets = [0, 0, 24], sizes = [2, 16, 8], strides = [1, 1, 1]} : vector<2x16x32xf32> to vector<2x16x8xf32>
    %167 = tpu.concatenate %163, %164, %165, %166 in 0 : vector<2x16x8xf32>, vector<2x16x8xf32>, vector<2x16x8xf32>, vector<2x16x8xf32> -> vector<8x16x8xf32>
    "tpu.trace_start"() <{level = 10 : i32, message = "bqd,bkd->bqk"}> : () -> ()
    %cst_44 = arith.constant dense<0.000000e+00> : vector<8x8x16xf32>
    %168 = tpu.matmul %155, %161, %cst_44 {dimension_numbers = #tpu.dot_dimension_numbers<[2], [2], [1], [1], [0, 0, 0, 1, 1, 1], [0], [0]>} : vector<8x8x8xf32>, vector<8x16x8xf32>, vector<8x8x16xf32> -> vector<8x8x16xf32>
    "tpu.trace_stop"() : () -> ()
    %169 = vector.shape_cast %3 : vector<8x16xf32> to vector<1x8x16xf32>
    %170 = vector.broadcast %169 : vector<1x8x16xf32> to vector<8x8x16xf32>
    %171 = arith.addf %168, %170 : vector<8x8x16xf32>
    %cst_45 = arith.constant dense<0xFF800000> : vector<8x8xf32>
    %172 = vector.multi_reduction <maximumf>, %171, %cst_45 [2] : vector<8x8x16xf32> to vector<8x8xf32>
    %173 = vector.shape_cast %172 : vector<8x8xf32> to vector<8x8x1xf32>
    %174 = vector.broadcast %173 : vector<8x8x1xf32> to vector<8x8x16xf32>
    %175 = arith.subf %171, %174 : vector<8x8x16xf32>
    %176 = math.exp %175 : vector<8x8x16xf32>
    %cst_46 = arith.constant dense<0.000000e+00> : vector<8x8xf32>
    %177 = vector.multi_reduction <add>, %176, %cst_46 [2] : vector<8x8x16xf32> to vector<8x8xf32>
    %178 = vector.shape_cast %177 : vector<8x8xf32> to vector<8x8x1xf32>
    "tpu.trace_start"() <{level = 10 : i32, message = "bqk,bkd->bqd"}> : () -> ()
    %cst_47 = arith.constant dense<0.000000e+00> : vector<8x8x8xf32>
    %179 = tpu.matmul %176, %167, %cst_47 {dimension_numbers = #tpu.dot_dimension_numbers<[2], [1], [1], [2], [0, 0, 0, 1, 1, 2], [0], [0]>} : vector<8x8x16xf32>, vector<8x16x8xf32>, vector<8x8x8xf32> -> vector<8x8x8xf32>
    "tpu.trace_stop"() : () -> ()
    %cst_48 = arith.constant 1.000000e+00 : f32
    %180 = vector.broadcast %cst_48 : f32 to vector<8x8x1xf32>
    %181 = arith.divf %180, %178 : vector<8x8x1xf32>
    %182 = vector.broadcast %181 : vector<8x8x1xf32> to vector<8x8x8xf32>
    %183 = arith.mulf %179, %182 : vector<8x8x8xf32>
    %184 = vector.extract_strided_slice %183 {offsets = [0, 0, 0], sizes = [2, 8, 8], strides = [1, 1, 1]} : vector<8x8x8xf32> to vector<2x8x8xf32>
    %185 = vector.extract_strided_slice %183 {offsets = [2, 0, 0], sizes = [2, 8, 8], strides = [1, 1, 1]} : vector<8x8x8xf32> to vector<2x8x8xf32>
    %186 = vector.extract_strided_slice %183 {offsets = [4, 0, 0], sizes = [2, 8, 8], strides = [1, 1, 1]} : vector<8x8x8xf32> to vector<2x8x8xf32>
    %187 = vector.extract_strided_slice %183 {offsets = [6, 0, 0], sizes = [2, 8, 8], strides = [1, 1, 1]} : vector<8x8x8xf32> to vector<2x8x8xf32>
    %188 = tpu.concatenate %184, %185, %186, %187 in 2 : vector<2x8x8xf32>, vector<2x8x8xf32>, vector<2x8x8xf32>, vector<2x8x8xf32> -> vector<2x8x32xf32>
    %189 = vector.shape_cast %188 : vector<2x8x32xf32> to vector<16x32xf32>
    %cst_49 = arith.constant dense<0.000000e+00> : vector<16x128xf32>
    %190 = tpu.matmul %189, %12, %cst_49 {dimension_numbers = #tpu.dot_dimension_numbers<[1], [0], [0], [1], [0, 0, 1, 1], [], []>} : vector<16x32xf32>, vector<32x128xf32>, vector<16x128xf32> -> vector<16x128xf32>
    %191 = vector.extract_strided_slice %190 {offsets = [0, 96], sizes = [16, 32], strides = [1, 1]} : vector<16x128xf32> to vector<16x32xf32>
    %192 = vector.broadcast %149 : vector<1x32xf32> to vector<16x32xf32>
    %193 = arith.addf %191, %192 : vector<16x32xf32>
    %194 = arith.addf %132, %193 : vector<16x32xf32>
    %195 = vector.extract_strided_slice %7 {offsets = [14, 0], sizes = [1, 32], strides = [1, 1]} : vector<18x32xf32> to vector<1x32xf32>
    %196 = vector.extract_strided_slice %7 {offsets = [15, 0], sizes = [1, 32], strides = [1, 1]} : vector<18x32xf32> to vector<1x32xf32>
    %cst_50 = arith.constant dense<0.000000e+00> : vector<16xf32>
    %197 = vector.multi_reduction <add>, %194, %cst_50 [1] : vector<16x32xf32> to vector<16xf32>
    %198 = vector.shape_cast %197 : vector<16xf32> to vector<16x1xf32>
    %cst_51 = arith.constant 3.200000e+01 : f32
    %199 = vector.broadcast %cst_51 : f32 to vector<16x1xf32>
    %200 = arith.divf %198, %199 : vector<16x1xf32>
    %201 = vector.broadcast %200 : vector<16x1xf32> to vector<16x32xf32>
    %202 = arith.subf %194, %201 : vector<16x32xf32>
    %203 = arith.mulf %202, %202 : vector<16x32xf32>
    %cst_52 = arith.constant dense<0.000000e+00> : vector<16xf32>
    %204 = vector.multi_reduction <add>, %203, %cst_52 [1] : vector<16x32xf32> to vector<16xf32>
    %205 = vector.shape_cast %204 : vector<16xf32> to vector<16x1xf32>
    %cst_53 = arith.constant 3.200000e+01 : f32
    %206 = vector.broadcast %cst_53 : f32 to vector<16x1xf32>
    %207 = arith.divf %205, %206 : vector<16x1xf32>
    %cst_54 = arith.constant 9.99999974E-6 : f32
    %208 = vector.broadcast %cst_54 : f32 to vector<16x1xf32>
    %209 = arith.addf %207, %208 : vector<16x1xf32>
    %210 = math.rsqrt %209 : vector<16x1xf32>
    %211 = vector.broadcast %210 : vector<16x1xf32> to vector<16x32xf32>
    %212 = arith.mulf %202, %211 : vector<16x32xf32>
    %213 = vector.broadcast %195 : vector<1x32xf32> to vector<16x32xf32>
    %214 = arith.mulf %212, %213 : vector<16x32xf32>
    %215 = vector.broadcast %196 : vector<1x32xf32> to vector<16x32xf32>
    %216 = arith.addf %214, %215 : vector<16x32xf32>
    %217 = vector.extract_strided_slice %5 {offsets = [1, 0, 0], sizes = [1, 32, 64], strides = [1, 1, 1]} : vector<2x32x64xf32> to vector<1x32x64xf32>
    %218 = vector.shape_cast %217 : vector<1x32x64xf32> to vector<32x64xf32>
    %cst_55 = arith.constant dense<0.000000e+00> : vector<16x64xf32>
    %219 = tpu.matmul %216, %218, %cst_55 {dimension_numbers = #tpu.dot_dimension_numbers<[1], [0], [0], [1], [0, 0, 1, 1], [], []>} : vector<16x32xf32>, vector<32x64xf32>, vector<16x64xf32> -> vector<16x64xf32>
    %220 = vector.extract_strided_slice %8 {offsets = [1, 0], sizes = [1, 64], strides = [1, 1]} : vector<2x64xf32> to vector<1x64xf32>
    %221 = vector.broadcast %220 : vector<1x64xf32> to vector<16x64xf32>
    %222 = arith.addf %219, %221 : vector<16x64xf32>
    %cst_56 = arith.constant 0.000000e+00 : f32
    %223 = vector.broadcast %cst_56 : f32 to vector<16x64xf32>
    %224 = arith.maximumf %222, %223 : vector<16x64xf32>
    %225 = vector.extract_strided_slice %6 {offsets = [1, 0, 0], sizes = [1, 64, 32], strides = [1, 1, 1]} : vector<2x64x32xf32> to vector<1x64x32xf32>
    %226 = vector.shape_cast %225 : vector<1x64x32xf32> to vector<64x32xf32>
    %cst_57 = arith.constant dense<0.000000e+00> : vector<16x32xf32>
    %227 = tpu.matmul %224, %226, %cst_57 {dimension_numbers = #tpu.dot_dimension_numbers<[1], [0], [0], [1], [0, 0, 1, 1], [], []>} : vector<16x64xf32>, vector<64x32xf32>, vector<16x32xf32> -> vector<16x32xf32>
    %228 = vector.extract_strided_slice %7 {offsets = [9, 0], sizes = [1, 32], strides = [1, 1]} : vector<18x32xf32> to vector<1x32xf32>
    %229 = vector.broadcast %228 : vector<1x32xf32> to vector<16x32xf32>
    %230 = arith.addf %227, %229 : vector<16x32xf32>
    %231 = arith.addf %216, %230 : vector<16x32xf32>
    %232 = vector.extract_strided_slice %7 {offsets = [16, 0], sizes = [1, 32], strides = [1, 1]} : vector<18x32xf32> to vector<1x32xf32>
    %233 = vector.extract_strided_slice %7 {offsets = [17, 0], sizes = [1, 32], strides = [1, 1]} : vector<18x32xf32> to vector<1x32xf32>
    %cst_58 = arith.constant dense<0.000000e+00> : vector<16xf32>
    %234 = vector.multi_reduction <add>, %231, %cst_58 [1] : vector<16x32xf32> to vector<16xf32>
    %235 = vector.shape_cast %234 : vector<16xf32> to vector<16x1xf32>
    %cst_59 = arith.constant 3.200000e+01 : f32
    %236 = vector.broadcast %cst_59 : f32 to vector<16x1xf32>
    %237 = arith.divf %235, %236 : vector<16x1xf32>
    %238 = vector.broadcast %237 : vector<16x1xf32> to vector<16x32xf32>
    %239 = arith.subf %231, %238 : vector<16x32xf32>
    %240 = arith.mulf %239, %239 : vector<16x32xf32>
    %cst_60 = arith.constant dense<0.000000e+00> : vector<16xf32>
    %241 = vector.multi_reduction <add>, %240, %cst_60 [1] : vector<16x32xf32> to vector<16xf32>
    %242 = vector.shape_cast %241 : vector<16xf32> to vector<16x1xf32>
    %cst_61 = arith.constant 3.200000e+01 : f32
    %243 = vector.broadcast %cst_61 : f32 to vector<16x1xf32>
    %244 = arith.divf %242, %243 : vector<16x1xf32>
    %cst_62 = arith.constant 9.99999974E-6 : f32
    %245 = vector.broadcast %cst_62 : f32 to vector<16x1xf32>
    %246 = arith.addf %244, %245 : vector<16x1xf32>
    %247 = math.rsqrt %246 : vector<16x1xf32>
    %248 = vector.broadcast %247 : vector<16x1xf32> to vector<16x32xf32>
    %249 = arith.mulf %239, %248 : vector<16x32xf32>
    %250 = vector.broadcast %232 : vector<1x32xf32> to vector<16x32xf32>
    %251 = arith.mulf %249, %250 : vector<16x32xf32>
    %252 = vector.broadcast %233 : vector<1x32xf32> to vector<16x32xf32>
    %253 = arith.addf %251, %252 : vector<16x32xf32>
    %254 = vector.shape_cast %253 : vector<16x32xf32> to vector<2x8x32xf32>
    %c0_63 = arith.constant 0 : index
    %c0_64 = arith.constant 0 : index
    %c0_65 = arith.constant 0 : index
    %255 = vector.load %arg10[%c0_63, %c0_64, %c0_65] : memref<2x8x32xf32, #tpu.memory_space<vmem>>, vector<2x8x32xf32>
    tpu.vector_store %arg10[%c0_63, %c0_64, %c0_65], %254 {strides = array<i32>} : memref<2x8x32xf32, #tpu.memory_space<vmem>>, vector<2x8x32xf32>,
    return
  }
  func.func @transform_0(%arg0: i32) -> (i32, i32, i32) {
    %c0_i32 = arith.constant 0 : i32
    %c0_i32_0 = arith.constant 0 : i32
    %c0_i32_1 = arith.constant 0 : i32
    return %arg0, %c0_i32, %c0_i32_0 : i32, i32, i32
  }
  func.func @transform_1(%arg0: i32) -> (i32, i32, i32) {
    %c0_i32 = arith.constant 0 : i32
    %c0_i32_0 = arith.constant 0 : i32
    %c0_i32_1 = arith.constant 0 : i32
    return %arg0, %c0_i32, %c0_i32_0 : i32, i32, i32
  }
  func.func @transform_2(%arg0: i32) -> (i32, i32) {
    %c0_i32 = arith.constant 0 : i32
    %c0_i32_0 = arith.constant 0 : i32
    %c0_i32_1 = arith.constant 0 : i32
    return %c0_i32, %c0_i32_0 : i32, i32
  }
  func.func @transform_3(%arg0: i32) -> (i32, i32) {
    %c0_i32 = arith.constant 0 : i32
    %c0_i32_0 = arith.constant 0 : i32
    %c0_i32_1 = arith.constant 0 : i32
    return %c0_i32, %c0_i32_0 : i32, i32
  }
  func.func @transform_4(%arg0: i32) -> (i32, i32) {
    %c0_i32 = arith.constant 0 : i32
    %c0_i32_0 = arith.constant 0 : i32
    %c0_i32_1 = arith.constant 0 : i32
    return %c0_i32, %c0_i32_0 : i32, i32
  }
  func.func @transform_5(%arg0: i32) -> (i32, i32, i32) {
    %c0_i32 = arith.constant 0 : i32
    %c0_i32_0 = arith.constant 0 : i32
    %c0_i32_1 = arith.constant 0 : i32
    %c0_i32_2 = arith.constant 0 : i32
    return %c0_i32, %c0_i32_0, %c0_i32_1 : i32, i32, i32
  }
  func.func @transform_6(%arg0: i32) -> (i32, i32, i32) {
    %c0_i32 = arith.constant 0 : i32
    %c0_i32_0 = arith.constant 0 : i32
    %c0_i32_1 = arith.constant 0 : i32
    %c0_i32_2 = arith.constant 0 : i32
    return %c0_i32, %c0_i32_0, %c0_i32_1 : i32, i32, i32
  }
  func.func @transform_7(%arg0: i32) -> (i32, i32) {
    %c0_i32 = arith.constant 0 : i32
    %c0_i32_0 = arith.constant 0 : i32
    %c0_i32_1 = arith.constant 0 : i32
    return %c0_i32, %c0_i32_0 : i32, i32
  }
  func.func @transform_8(%arg0: i32) -> (i32, i32) {
    %c0_i32 = arith.constant 0 : i32
    %c0_i32_0 = arith.constant 0 : i32
    %c0_i32_1 = arith.constant 0 : i32
    return %c0_i32, %c0_i32_0 : i32, i32
  }
  func.func @transform_9(%arg0: i32) -> (i32, i32, i32) {
    %c0_i32 = arith.constant 0 : i32
    %c0_i32_0 = arith.constant 0 : i32
    %c0_i32_1 = arith.constant 0 : i32
    return %arg0, %c0_i32, %c0_i32_0 : i32, i32, i32
  }
}

</mosaic_0001>

<llo_original>
// kernel: tpu_custom_call.1
$region0: #{tpu_custom_call.1}
  #allocation0 [shape = 'u32[]', space=smem, size = 0x4, offset = 0x4, fixed_abs, tag = 'smem constant byte address 0x4 - core index']
  #allocation1 [shape = 'u32[72,128]{1,0:T(1,128)}', space=vmem, size = 0x9000, scoped, tag = 'internal scratch']
  %s0 = inlined_call_operand.vmem [shape: f32[2,16,32], index: 0, kind: input, shape index: {}]
  %s1 = inlined_call_operand.hbm [shape: f32[2,8,32], index: 1, kind: input, shape index: {}]
  %s2 = inlined_call_operand.vmem [shape: f32[8,8], index: 2, kind: input, shape index: {}]
  %s3 = inlined_call_operand.hbm [shape: f32[8,16], index: 3, kind: input, shape index: {}]
  %s4 = inlined_call_operand.vmem [shape: f32[32,256], index: 4, kind: input, shape index: {}]
  %s5 = inlined_call_operand.vmem [shape: f32[2,32,64], index: 5, kind: input, shape index: {}]
  %s6 = inlined_call_operand.vmem [shape: f32[2,64,32], index: 6, kind: input, shape index: {}]
  %s7 = inlined_call_operand.vmem [shape: f32[18,32], index: 7, kind: input, shape index: {}]
  %s8 = inlined_call_operand.vmem [shape: f32[2,64], index: 8, kind: input, shape index: {}]
  %s9 = inlined_call_operand.hbm [shape: f32[2,8,32], index: 9, kind: output, shape index: {}]
  %s10 = sld [smem:[#allocation0]]
  $region54: #{tpu_custom_call.1} parent=0
    _
  %s12 = ssub.s32 1, %s10
  %s13 = scalar_select 0, %s12, %s10
  $region1: #{tpu_custom_call.1} parent=0
    #allocation2 [shape = 'u8[8192]{0}', space=vmem, size = 0x2000, scoped, tag = 'input window, operand 1, single buffered']
    #allocation3 [shape = 's32[1]{0}', space=sflag, size = 0x4, scoped, tag = 'scoped memory for tpu_custom_call.1']
    #allocation4 [shape = 's32[1]{0}', space=sflag, size = 0x4, scoped, tag = 'scoped memory for tpu_custom_call.1']
    #allocation5 [shape = 'u8[4096]{0}', space=vmem, size = 0x1000, scoped, tag = 'input window, operand 3, single buffered']
    #allocation6 [shape = 's32[1]{0}', space=sflag, size = 0x4, scoped, tag = 'scoped memory for tpu_custom_call.1']
    #allocation7 [shape = 'u8[8192]{0}', space=vmem, size = 0x2000, scoped, tag = 'output window, operand 0, single buffered']
    %14 = vsyncpa [#allocation3], 0
    %15 = vsyncpa [#allocation6], 0
    %16 = vsyncpa [#allocation4], 0
    // Predicated region
    $region2: #{tpu_custom_call.1} parent=1 // pred_check
      _
    $region3: #{tpu_custom_call.1} parent=1 // pred_check_branch
      %18 = sbr.rel (0) target = $region5
    $region4: #{tpu_custom_call.1} parent=1 // pred_region
      _
    $region5: #{tpu_custom_call.1} parent=1 // pred_fallthru
      _
    // Predicated region
    $region6: #{tpu_custom_call.1} parent=1 // pred_check
      _
    $region7: #{tpu_custom_call.1} parent=1 // pred_check_branch
      %20 = sbr.rel (0) target = $region9
    $region8: #{tpu_custom_call.1} parent=1 // pred_region
      %22 = vsyncadd [#allocation3], 0
      %s23 = sshll.u32 %s1, 4
      %s24 = int_to_ptr.hbm [resolvable:$true] %s23
      %s25 = sshll.u32 [#allocation2], 4
      %s26 = int_to_ptr.vmem [resolvable:$true] %s25
      %31 = dma.hbm_to_vmem [thread:$0]  %s24, 256, %s26, [#allocation3], 128, 128, 8
    $region9: #{tpu_custom_call.1} parent=1 // pred_fallthru
      _
    // Predicated region
    $region10: #{tpu_custom_call.1} parent=1 // pred_check
      _
    $region11: #{tpu_custom_call.1} parent=1 // pred_check_branch
      %33 = sbr.rel (0) target = $region13
    $region12: #{tpu_custom_call.1} parent=1 // pred_region
      _
    $region13: #{tpu_custom_call.1} parent=1 // pred_fallthru
      _
    // Predicated region
    $region14: #{tpu_custom_call.1} parent=1 // pred_check
      _
    $region15: #{tpu_custom_call.1} parent=1 // pred_check_branch
      %35 = sbr.rel (0) target = $region17
    $region16: #{tpu_custom_call.1} parent=1 // pred_region
      %37 = vsyncadd [#allocation6], 0
      %s39 = sshll.u32 %s3, 4
      %s40 = int_to_ptr.hbm [resolvable:$true] %s39
      %s41 = sshll.u32 [#allocation5], 4
      %s42 = int_to_ptr.vmem [resolvable:$true] %s41
      %44 = dma.hbm_to_vmem [thread:$0]  %s40, 128, %s42, [#allocation6]
    $region17: #{tpu_custom_call.1} parent=1 // pred_fallthru
      _
    // Predicated region
    $region18: #{tpu_custom_call.1} parent=1 // pred_check
      _
    $region19: #{tpu_custom_call.1} parent=1 // pred_check_branch
      %46 = sbr.rel (0) target = $region21
    $region20: #{tpu_custom_call.1} parent=1 // pred_region
      _
    $region21: #{tpu_custom_call.1} parent=1 // pred_fallthru
      _
    // Predicated region
    $region22: #{tpu_custom_call.1} parent=1 // pred_check
      _
    $region23: #{tpu_custom_call.1} parent=1 // pred_check_branch
      %48 = sbr.rel (0) target = $region25
    $region24: #{tpu_custom_call.1} parent=1 // pred_region
      _
    $region25: #{tpu_custom_call.1} parent=1 // pred_fallthru
      _
    // Predicated region
    $region26: #{tpu_custom_call.1} parent=1 // pred_check
      _
    $region27: #{tpu_custom_call.1} parent=1 // pred_check_branch
      %50 = sbr.rel (0) target = $region29
    $region28: #{tpu_custom_call.1} parent=1 // pred_region
      _
    $region29: #{tpu_custom_call.1} parent=1 // pred_fallthru
      _
    // Predicated region
    $region30: #{tpu_custom_call.1} parent=1 // pred_check
      _
    $region31: #{tpu_custom_call.1} parent=1 // pred_check_branch
      %52 = sbr.rel (0) target = $region33
    $region32: #{tpu_custom_call.1} parent=1 // pred_region
      _
    $region33: #{tpu_custom_call.1} parent=1 // pred_fallthru
      _
    // Predicated region
    $region34: #{tpu_custom_call.1} parent=1 // pred_check
      _
    $region35: #{tpu_custom_call.1} parent=1 // pred_check_branch
      %54 = sbr.rel (0) target = $region37
    $region36: #{tpu_custom_call.1} parent=1 // pred_region
      _
    $region37: #{tpu_custom_call.1} parent=1 // pred_fallthru
      _
    // Predicated region
    $region38: #{tpu_custom_call.1} parent=1 // pred_check
      _
    $region39: #{tpu_custom_call.1} parent=1 // pred_check_branch
      %56 = sbr.rel (0) target = $region41
    $region40: #{tpu_custom_call.1} parent=1 // pred_region
      %58 = dma.done [#allocation3], 256
    $region41: #{tpu_custom_call.1} parent=1 // pred_fallthru
      _
    // Predicated region
    $region42: #{tpu_custom_call.1} parent=1 // pred_check
      _
    $region43: #{tpu_custom_call.1} parent=1 // pred_check_branch
      %60 = sbr.rel (0) target = $region45
    $region44: #{tpu_custom_call.1} parent=1 // pred_region
      %62 = dma.done [#allocation6], 128
    $region45: #{tpu_custom_call.1} parent=1 // pred_fallthru
      _
    %v63 = vld [vmem:[#allocation2] sm:$0xff]
    %v64 = vld [vmem:[#allocation2 + $0x8] sm:$0xff]
    %v65 = vld [vmem:[%s0] sm:$0xff]
    %v66 = vld [vmem:[%s0 + $0x8] sm:$0xff]
    %v67 = vld [vmem:[%s0 + $0x10] sm:$0xff]
    %v68 = vld [vmem:[%s0 + $0x18] sm:$0xff]
    %v69 = vld [vmem:[%s2] sm:$0xff]
    %v70 = vld [vmem:[#allocation5] sm:$0xff]
    %v71 = vld [vmem:[%s4] sm:$0xff]
    %v72 = vld [vmem:[%s4 + $0x8] sm:$0xff]
    %v73 = vld [vmem:[%s4 + $0x10] sm:$0xff]
    %v74 = vld [vmem:[%s4 + $0x18] sm:$0xff]
    %v75 = vld [vmem:[%s4 + $0x20] sm:$0xff]
    %v76 = vld [vmem:[%s4 + $0x28] sm:$0xff]
    %v77 = vld [vmem:[%s4 + $0x30] sm:$0xff]
    %v78 = vld [vmem:[%s4 + $0x38] sm:$0xff]
    %v79 = vld [vmem:[%s5] sm:$0xff]
    %v80 = vld [vmem:[%s5 + $0x8] sm:$0xff]
    %v81 = vld [vmem:[%s5 + $0x10] sm:$0xff]
    %v82 = vld [vmem:[%s5 + $0x18] sm:$0xff]
    %v83 = vld [vmem:[%s5 + $0x20] sm:$0xff]
    %v84 = vld [vmem:[%s5 + $0x28] sm:$0xff]
    %v85 = vld [vmem:[%s5 + $0x30] sm:$0xff]
    %v86 = vld [vmem:[%s5 + $0x38] sm:$0xff]
    %v87 = vld [vmem:[%s6] sm:$0xff]
    %v88 = vld [vmem:[%s6 + $0x8] sm:$0xff]
    %v89 = vld [vmem:[%s6 + $0x10] sm:$0xff]
    %v90 = vld [vmem:[%s6 + $0x18] sm:$0xff]
    %v91 = vld [vmem:[%s6 + $0x20] sm:$0xff]
    %v92 = vld [vmem:[%s6 + $0x28] sm:$0xff]
    %v93 = vld [vmem:[%s6 + $0x30] sm:$0xff]
    %v94 = vld [vmem:[%s6 + $0x38] sm:$0xff]
    %v95 = vld [vmem:[%s6 + $0x40] sm:$0xff]
    %v96 = vld [vmem:[%s6 + $0x48] sm:$0xff]
    %v97 = vld [vmem:[%s6 + $0x50] sm:$0xff]
    %v98 = vld [vmem:[%s6 + $0x58] sm:$0xff]
    %v99 = vld [vmem:[%s6 + $0x60] sm:$0xff]
    %v100 = vld [vmem:[%s6 + $0x68] sm:$0xff]
    %v101 = vld [vmem:[%s6 + $0x70] sm:$0xff]
    %v102 = vld [vmem:[%s6 + $0x78] sm:$0xff]
    %v103 = vld [vmem:[%s7] sm:$0xff]
    %v104 = vld [vmem:[%s7 + $0x8] sm:$0xff]
    %v105 = vld [vmem:[%s7 + $0x10] sm:$0x3]
    %v106 = vld [vmem:[%s8] sm:$0x3]
    %vm107 = vcmask 261120
    %v109 = vsel %vm107, %v63, 0
    %v112 = vsel %vm107, %v64, 0
    %114 = vmatpush.msra.mxu0 0.0
    %115 = vmatpush.msra.mxu0 0.0
    %116 = vmatpush.msra.mxu0 0.0
    %117 = vmatpush.msra.mxu0 0.0
    %118 = vmatpush.msra.mxu0 0.0
    %119 = vmatpush.msra.mxu0 0.0
    %120 = vmatpush.msra.mxu0 0.0
    %121 = vmatpush.msra.mxu0 0.0
    %122 = vmatpush.msra.mxu0 0.0
    %123 = vmatpush.msra.mxu0 0.0
    %124 = vmatpush.msra.mxu0 0.0
    %125 = vmatpush.msra.mxu0 0.0
    %126 = vmatpush.msra.mxu0 %v77
    %127 = vmatpush.msra.mxu0 %v75
    %128 = vmatpush.msra.mxu0 %v73
    %129 = vmatpush.msra.mxu0 %v71
    %130 = vmatmul.f32.gmra.mxu0 %v109
    %v131 = vpop.f32.mrf.mxu0
    %v132 = vadd.f32 0.0, %v131
    %133 = vmatmul.f32.gmra.mxu0 %v112
    %v134 = vpop.f32.mrf.mxu0
    %v135 = vadd.f32 0.0, %v134
    %136 = vdwg.mxu0
    %v137 = vperm.slane %v103, 0
    %v138 = vadd.f32 %v132, %v137
    %v139 = vadd.f32 %v135, %v137
    %v140 = vmul.f32 %v138, 0.17677669
    %v141 = vmul.f32 %v139, 0.17677669
    %v142 = vperm.slane %v103, 1
    %144 = vrot.lane.b32.xlu0 %v142, 32
    %v145 = vpop.permute.xlu0 %144
    %v147 = vadd.f32 %v132, %v145
    %v148 = vadd.f32 %v135, %v145
    %v149 = vperm.slane %v103, 2
    %151 = vrot.lane.b32.xlu0 %v149, 64
    %v152 = vpop.permute.xlu0 %151
    %v154 = vadd.f32 %v132, %v152
    %v155 = vadd.f32 %v135, %v152
    %158 = vrot.lane.b32.xlu0 %v140, 120
    %v159 = vpop.permute.xlu0 %158
    %160 = vrot.lane.b32.xlu0 %v141, 120
    %v161 = vpop.permute.xlu0 %160
    %162 = vrot.lane.b32.xlu0 %v140, 112
    %v163 = vpop.permute.xlu0 %162
    %164 = vrot.lane.b32.xlu0 %v141, 112
    %v165 = vpop.permute.xlu0 %164
    %166 = vrot.lane.b32.xlu0 %v140, 104
    %v167 = vpop.permute.xlu0 %166
    %168 = vrot.lane.b32.xlu0 %v141, 104
    %v169 = vpop.permute.xlu0 %168
    %172 = vrot.lane.b32.xlu0 %v147, 120
    %v173 = vpop.permute.xlu0 %172
    %174 = vrot.lane.b32.xlu0 %v148, 120
    %v175 = vpop.permute.xlu0 %174
    %176 = vrot.lane.b32.xlu0 %v147, 112
    %v177 = vpop.permute.xlu0 %176
    %178 = vrot.lane.b32.xlu0 %v148, 112
    %v179 = vpop.permute.xlu0 %178
    %180 = vrot.lane.b32.xlu0 %v147, 104
    %v181 = vpop.permute.xlu0 %180
    %182 = vrot.lane.b32.xlu0 %v148, 104
    %v183 = vpop.permute.xlu0 %182
    %186 = vrot.lane.b32.xlu0 %v154, 120
    %v187 = vpop.permute.xlu0 %186
    %188 = vrot.lane.b32.xlu0 %v155, 120
    %v189 = vpop.permute.xlu0 %188
    %190 = vrot.lane.b32.xlu0 %v154, 112
    %v191 = vpop.permute.xlu0 %190
    %192 = vrot.lane.b32.xlu0 %v155, 112
    %v193 = vpop.permute.xlu0 %192
    %194 = vrot.lane.b32.xlu0 %v154, 104
    %v195 = vpop.permute.xlu0 %194
    %196 = vrot.lane.b32.xlu0 %v155, 104
    %v197 = vpop.permute.xlu0 %196
    %198 = vrot.lane.b32.xlu0 %v147, 96
    %v199 = vpop.permute.xlu0 %198
    %vm200 = vcmask 64512
    %v201 = vsel %vm200, %v140, 0
    %v203 = vsel %vm200, %v199, 0
    %205 = vmatpush.xpose.msra.mxu0 0.0
    %206 = vmatpush.xpose.msra.mxu0 0.0
    %207 = vmatpush.xpose.msra.mxu0 0.0
    %208 = vmatpush.xpose.msra.mxu0 0.0
    %209 = vmatpush.xpose.msra.mxu0 0.0
    %210 = vmatpush.xpose.msra.mxu0 0.0
    %211 = vmatpush.xpose.msra.mxu0 0.0
    %212 = vmatpush.xpose.msra.mxu0 0.0
    %213 = vmatpush.xpose.msra.mxu0 0.0
    %214 = vmatpush.xpose.msra.mxu0 0.0
    %215 = vmatpush.xpose.msra.mxu0 0.0
    %216 = vmatpush.xpose.msra.mxu0 0.0
    %217 = vmatpush.xpose.msra.mxu0 0.0
    %218 = vmatpush.xpose.msra.mxu0 0.0
    %219 = vmatpush.xpose.msra.mxu0 0.0
    %220 = vmatpush.xpose.msra.mxu0 %v203
    %221 = vmatmul.f32.gmra.mxu0 %v201
    %v222 = vpop.f32.mrf.mxu0
    %v223 = vadd.f32 %v69, %v222
    %224 = vdwg.mxu0
    %225 = vrot.lane.b32.xlu0 %v148, 96
    %v226 = vpop.permute.xlu0 %225
    %v227 = vsel %vm200, %v141, 0
    %v229 = vsel %vm200, %v226, 0
    %231 = vmatpush.xpose.msra.mxu0 0.0
    %232 = vmatpush.xpose.msra.mxu0 0.0
    %233 = vmatpush.xpose.msra.mxu0 0.0
    %234 = vmatpush.xpose.msra.mxu0 0.0
    %235 = vmatpush.xpose.msra.mxu0 0.0
    %236 = vmatpush.xpose.msra.mxu0 0.0
    %237 = vmatpush.xpose.msra.mxu0 0.0
    %238 = vmatpush.xpose.msra.mxu0 0.0
    %239 = vmatpush.xpose.msra.mxu0 0.0
    %240 = vmatpush.xpose.msra.mxu0 0.0
    %241 = vmatpush.xpose.msra.mxu0 0.0
    %242 = vmatpush.xpose.msra.mxu0 0.0
    %243 = vmatpush.xpose.msra.mxu0 0.0
    %244 = vmatpush.xpose.msra.mxu0 0.0
    %245 = vmatpush.xpose.msra.mxu0 0.0
    %246 = vmatpush.xpose.msra.mxu0 %v229
    %247 = vmatmul.f32.gmra.mxu0 %v227
    %v248 = vpop.f32.mrf.mxu0
    %v249 = vadd.f32 %v69, %v248
    %250 = vdwg.mxu0
    %251 = vrot.lane.b32.xlu0 %v173, 96
    %v252 = vpop.permute.xlu0 %251
    %v253 = vsel %vm200, %v159, 0
    %v255 = vsel %vm200, %v252, 0
    %257 = vmatpush.xpose.msra.mxu0 0.0
    %258 = vmatpush.xpose.msra.mxu0 0.0
    %259 = vmatpush.xpose.msra.mxu0 0.0
    %260 = vmatpush.xpose.msra.mxu0 0.0
    %261 = vmatpush.xpose.msra.mxu0 0.0
    %262 = vmatpush.xpose.msra.mxu0 0.0
    %263 = vmatpush.xpose.msra.mxu0 0.0
    %264 = vmatpush.xpose.msra.mxu0 0.0
    %265 = vmatpush.xpose.msra.mxu0 0.0
    %266 = vmatpush.xpose.msra.mxu0 0.0
    %267 = vmatpush.xpose.msra.mxu0 0.0
    %268 = vmatpush.xpose.msra.mxu0 0.0
    %269 = vmatpush.xpose.msra.mxu0 0.0
    %270 = vmatpush.xpose.msra.mxu0 0.0
    %271 = vmatpush.xpose.msra.mxu0 0.0
    %272 = vmatpush.xpose.msra.mxu0 %v255
    %273 = vmatmul.f32.gmra.mxu0 %v253
    %v274 = vpop.f32.mrf.mxu0
    %v275 = vadd.f32 %v69, %v274
    %276 = vdwg.mxu0
    %277 = vrot.lane.b32.xlu0 %v175, 96
    %v278 = vpop.permute.xlu0 %277
    %v279 = vsel %vm200, %v161, 0
    %v281 = vsel %vm200, %v278, 0
    %283 = vmatpush.xpose.msra.mxu0 0.0
    %284 = vmatpush.xpose.msra.mxu0 0.0
    %285 = vmatpush.xpose.msra.mxu0 0.0
    %286 = vmatpush.xpose.msra.mxu0 0.0
    %287 = vmatpush.xpose.msra.mxu0 0.0
    %288 = vmatpush.xpose.msra.mxu0 0.0
    %289 = vmatpush.xpose.msra.mxu0 0.0
    %290 = vmatpush.xpose.msra.mxu0 0.0
    %291 = vmatpush.xpose.msra.mxu0 0.0
    %292 = vmatpush.xpose.msra.mxu0 0.0
    %293 = vmatpush.xpose.msra.mxu0 0.0
    %294 = vmatpush.xpose.msra.mxu0 0.0
    %295 = vmatpush.xpose.msra.mxu0 0.0
    %296 = vmatpush.xpose.msra.mxu0 0.0
    %297 = vmatpush.xpose.msra.mxu0 0.0
    %298 = vmatpush.xpose.msra.mxu0 %v281
    %299 = vmatmul.f32.gmra.mxu0 %v279
    %v300 = vpop.f32.mrf.mxu0
    %v301 = vadd.f32 %v69, %v300
    %302 = vdwg.mxu0
    %303 = vrot.lane.b32.xlu0 %v177, 96
    %v304 = vpop.permute.xlu0 %303
    %v305 = vsel %vm200, %v163, 0
    %v307 = vsel %vm200, %v304, 0
    %309 = vmatpush.xpose.msra.mxu0 0.0
    %310 = vmatpush.xpose.msra.mxu0 0.0
    %311 = vmatpush.xpose.msra.mxu0 0.0
    %312 = vmatpush.xpose.msra.mxu0 0.0
    %313 = vmatpush.xpose.msra.mxu0 0.0
    %314 = vmatpush.xpose.msra.mxu0 0.0
    %315 = vmatpush.xpose.msra.mxu0 0.0
    %316 = vmatpush.xpose.msra.mxu0 0.0
    %317 = vmatpush.xpose.msra.mxu0 0.0
    %318 = vmatpush.xpose.msra.mxu0 0.0
    %319 = vmatpush.xpose.msra.mxu0 0.0
    %320 = vmatpush.xpose.msra.mxu0 0.0
    %321 = vmatpush.xpose.msra.mxu0 0.0
    %322 = vmatpush.xpose.msra.mxu0 0.0
    %323 = vmatpush.xpose.msra.mxu0 0.0
    %324 = vmatpush.xpose.msra.mxu0 %v307
    %325 = vmatmul.f32.gmra.mxu0 %v305
    %v326 = vpop.f32.mrf.mxu0
    %v327 = vadd.f32 %v69, %v326
    %328 = vdwg.mxu0
    %329 = vrot.lane.b32.xlu0 %v179, 96
    %v330 = vpop.permute.xlu0 %329
    %v331 = vsel %vm200, %v165, 0
    %v333 = vsel %vm200, %v330, 0
    %335 = vmatpush.xpose.msra.mxu0 0.0
    %336 = vmatpush.xpose.msra.mxu0 0.0
    %337 = vmatpush.xpose.msra.mxu0 0.0
    %338 = vmatpush.xpose.msra.mxu0 0.0
    %339 = vmatpush.xpose.msra.mxu0 0.0
    %340 = vmatpush.xpose.msra.mxu0 0.0
    %341 = vmatpush.xpose.msra.mxu0 0.0
    %342 = vmatpush.xpose.msra.mxu0 0.0
    %343 = vmatpush.xpose.msra.mxu0 0.0
    %344 = vmatpush.xpose.msra.mxu0 0.0
    %345 = vmatpush.xpose.msra.mxu0 0.0
    %346 = vmatpush.xpose.msra.mxu0 0.0
    %347 = vmatpush.xpose.msra.mxu0 0.0
    %348 = vmatpush.xpose.msra.mxu0 0.0
    %349 = vmatpush.xpose.msra.mxu0 0.0
    %350 = vmatpush.xpose.msra.mxu0 %v333
    %351 = vmatmul.f32.gmra.mxu0 %v331
    %v352 = vpop.f32.mrf.mxu0
    %v353 = vadd.f32 %v69, %v352
    %354 = vdwg.mxu0
    %355 = vrot.lane.b32.xlu0 %v181, 96
    %v356 = vpop.permute.xlu0 %355
    %v357 = vsel %vm200, %v167, 0
    %v359 = vsel %vm200, %v356, 0
    %361 = vmatpush.xpose.msra.mxu0 0.0
    %362 = vmatpush.xpose.msra.mxu0 0.0
    %363 = vmatpush.xpose.msra.mxu0 0.0
    %364 = vmatpush.xpose.msra.mxu0 0.0
    %365 = vmatpush.xpose.msra.mxu0 0.0
    %366 = vmatpush.xpose.msra.mxu0 0.0
    %367 = vmatpush.xpose.msra.mxu0 0.0
    %368 = vmatpush.xpose.msra.mxu0 0.0
    %369 = vmatpush.xpose.msra.mxu0 0.0
    %370 = vmatpush.xpose.msra.mxu0 0.0
    %371 = vmatpush.xpose.msra.mxu0 0.0
    %372 = vmatpush.xpose.msra.mxu0 0.0
    %373 = vmatpush.xpose.msra.mxu0 0.0
    %374 = vmatpush.xpose.msra.mxu0 0.0
    %375 = vmatpush.xpose.msra.mxu0 0.0
    %376 = vmatpush.xpose.msra.mxu0 %v359
    %377 = vmatmul.f32.gmra.mxu0 %v357
    %v378 = vpop.f32.mrf.mxu0
    %v379 = vadd.f32 %v69, %v378
    %380 = vdwg.mxu0
    %381 = vrot.lane.b32.xlu0 %v183, 96
    %v382 = vpop.permute.xlu0 %381
    %v383 = vsel %vm200, %v169, 0
    %v385 = vsel %vm200, %v382, 0
    %387 = vmatpush.xpose.msra.mxu0 0.0
    %388 = vmatpush.xpose.msra.mxu0 0.0
    %389 = vmatpush.xpose.msra.mxu0 0.0
    %390 = vmatpush.xpose.msra.mxu0 0.0
    %391 = vmatpush.xpose.msra.mxu0 0.0
    %392 = vmatpush.xpose.msra.mxu0 0.0
    %393 = vmatpush.xpose.msra.mxu0 0.0
    %394 = vmatpush.xpose.msra.mxu0 0.0
    %395 = vmatpush.xpose.msra.mxu0 0.0
    %396 = vmatpush.xpose.msra.mxu0 0.0
    %397 = vmatpush.xpose.msra.mxu0 0.0
    %398 = vmatpush.xpose.msra.mxu0 0.0
    %399 = vmatpush.xpose.msra.mxu0 0.0
    %400 = vmatpush.xpose.msra.mxu0 0.0
    %401 = vmatpush.xpose.msra.mxu0 0.0
    %402 = vmatpush.xpose.msra.mxu0 %v385
    %403 = vmatmul.f32.gmra.mxu0 %v383
    %v404 = vpop.f32.mrf.mxu0
    %v405 = vadd.f32 %v69, %v404
    %406 = vdwg.mxu0
    %v407 = vsel %vm200, %v223, -inf
    %408 = vmax.xlane.f32.xlu0 %v407
    %v409 = vpop.xlane.xlu0 %408
    %v410 = vsel %vm200, %v249, -inf
    %411 = vmax.xlane.f32.xlu0 %v410
    %v412 = vpop.xlane.xlu0 %411
    %v413 = vsel %vm200, %v275, -inf
    %414 = vmax.xlane.f32.xlu0 %v413
    %v415 = vpop.xlane.xlu0 %414
    %v416 = vsel %vm200, %v301, -inf
    %417 = vmax.xlane.f32.xlu0 %v416
    %v418 = vpop.xlane.xlu0 %417
    %v419 = vsel %vm200, %v327, -inf
    %420 = vmax.xlane.f32.xlu0 %v419
    %v421 = vpop.xlane.xlu0 %420
    %v422 = vsel %vm200, %v353, -inf
    %423 = vmax.xlane.f32.xlu0 %v422
    %v424 = vpop.xlane.xlu0 %423
    %v425 = vsel %vm200, %v379, -inf
    %426 = vmax.xlane.f32.xlu0 %v425
    %v427 = vpop.xlane.xlu0 %426
    %v428 = vsel %vm200, %v405, -inf
    %429 = vmax.xlane.f32.xlu0 %v428
    %v430 = vpop.xlane.xlu0 %429
    %v431 = vsub.f32 %v223, %v409
    %v432 = vsub.f32 %v249, %v412
    %v433 = vsub.f32 %v275, %v415
    %v434 = vsub.f32 %v301, %v418
    %v435 = vsub.f32 %v327, %v421
    %v436 = vsub.f32 %v353, %v424
    %v437 = vsub.f32 %v379, %v427
    %v438 = vsub.f32 %v405, %v430
    %v439 = vmul.f32 %v431, 1.442695
    %v440 = vpow.pop %v439
    %v441 = vmul.f32 %v432, 1.442695
    %v442 = vpow.pop %v441
    %v443 = vmul.f32 %v433, 1.442695
    %v444 = vpow.pop %v443
    %v445 = vmul.f32 %v434, 1.442695
    %v446 = vpow.pop %v445
    %v447 = vmul.f32 %v435, 1.442695
    %v448 = vpow.pop %v447
    %v449 = vmul.f32 %v436, 1.442695
    %v450 = vpow.pop %v449
    %v451 = vmul.f32 %v437, 1.442695
    %v452 = vpow.pop %v451
    %v453 = vmul.f32 %v438, 1.442695
    %v454 = vpow.pop %v453
    %v455 = vsel %vm200, %v440, 0.0
    %456 = vadd.xlane.f32.xlu0 %v455
    %v457 = vpop.xlane.xlu0 %456
    %v458 = vsel %vm200, %v442, 0.0
    %459 = vadd.xlane.f32.xlu0 %v458
    %v460 = vpop.xlane.xlu0 %459
    %v461 = vsel %vm200, %v444, 0.0
    %462 = vadd.xlane.f32.xlu0 %v461
    %v463 = vpop.xlane.xlu0 %462
    %v464 = vsel %vm200, %v446, 0.0
    %465 = vadd.xlane.f32.xlu0 %v464
    %v466 = vpop.xlane.xlu0 %465
    %v467 = vsel %vm200, %v448, 0.0
    %468 = vadd.xlane.f32.xlu0 %v467
    %v469 = vpop.xlane.xlu0 %468
    %v470 = vsel %vm200, %v450, 0.0
    %471 = vadd.xlane.f32.xlu0 %v470
    %v472 = vpop.xlane.xlu0 %471
    %v473 = vsel %vm200, %v452, 0.0
    %474 = vadd.xlane.f32.xlu0 %v473
    %v475 = vpop.xlane.xlu0 %474
    %v476 = vsel %vm200, %v454, 0.0
    %477 = vadd.xlane.f32.xlu0 %v476
    %v478 = vpop.xlane.xlu0 %477
    %479 = vrot.lane.b32.xlu0 %v154, 64
    %v480 = vpop.permute.xlu0 %479
    %v483 = vsel %vm200, %v440, 0
    %485 = vmatpush.msra.mxu0 0.0
    %486 = vmatpush.msra.mxu0 0.0
    %487 = vmatpush.msra.mxu0 0.0
    %488 = vmatpush.msra.mxu0 0.0
    %489 = vmatpush.msra.mxu0 0.0
    %490 = vmatpush.msra.mxu0 0.0
    %491 = vmatpush.msra.mxu0 0.0
    %492 = vmatpush.msra.mxu0 0.0
    %493 = vmatpush.msra.mxu0 0.0
    %494 = vmatpush.msra.mxu0 0.0
    %495 = vmatpush.msra.mxu0 0.0
    %496 = vmatpush.msra.mxu0 0.0
    %497 = vmatpush.msra.mxu0 0.0
    %498 = vmatpush.msra.mxu0 0.0
    %499 = vmatpush.msra.mxu0 0.0
    %500 = vmatpush.msra.mxu0 %v480
    %501 = vmatmul.f32.gmra.mxu0 %v483
    %v502 = vpop.f32.mrf.mxu0
    %v503 = vadd.f32 0.0, %v502
    %504 = vdwg.mxu0
    %505 = vrot.lane.b32.xlu0 %v155, 64
    %v506 = vpop.permute.xlu0 %505
    %v509 = vsel %vm200, %v442, 0
    %511 = vmatpush.msra.mxu0 0.0
    %512 = vmatpush.msra.mxu0 0.0
    %513 = vmatpush.msra.mxu0 0.0
    %514 = vmatpush.msra.mxu0 0.0
    %515 = vmatpush.msra.mxu0 0.0
    %516 = vmatpush.msra.mxu0 0.0
    %517 = vmatpush.msra.mxu0 0.0
    %518 = vmatpush.msra.mxu0 0.0
    %519 = vmatpush.msra.mxu0 0.0
    %520 = vmatpush.msra.mxu0 0.0
    %521 = vmatpush.msra.mxu0 0.0
    %522 = vmatpush.msra.mxu0 0.0
    %523 = vmatpush.msra.mxu0 0.0
    %524 = vmatpush.msra.mxu0 0.0
    %525 = vmatpush.msra.mxu0 0.0
    %526 = vmatpush.msra.mxu0 %v506
    %527 = vmatmul.f32.gmra.mxu0 %v509
    %v528 = vpop.f32.mrf.mxu0
    %v529 = vadd.f32 0.0, %v528
    %530 = vdwg.mxu0
    %531 = vrot.lane.b32.xlu0 %v187, 64
    %v532 = vpop.permute.xlu0 %531
    %v535 = vsel %vm200, %v444, 0
    %537 = vmatpush.msra.mxu0 0.0
    %538 = vmatpush.msra.mxu0 0.0
    %539 = vmatpush.msra.mxu0 0.0
    %540 = vmatpush.msra.mxu0 0.0
    %541 = vmatpush.msra.mxu0 0.0
    %542 = vmatpush.msra.mxu0 0.0
    %543 = vmatpush.msra.mxu0 0.0
    %544 = vmatpush.msra.mxu0 0.0
    %545 = vmatpush.msra.mxu0 0.0
    %546 = vmatpush.msra.mxu0 0.0
    %547 = vmatpush.msra.mxu0 0.0
    %548 = vmatpush.msra.mxu0 0.0
    %549 = vmatpush.msra.mxu0 0.0
    %550 = vmatpush.msra.mxu0 0.0
    %551 = vmatpush.msra.mxu0 0.0
    %552 = vmatpush.msra.mxu0 %v532
    %553 = vmatmul.f32.gmra.mxu0 %v535
    %v554 = vpop.f32.mrf.mxu0
    %v555 = vadd.f32 0.0, %v554
    %556 = vdwg.mxu0
    %557 = vrot.lane.b32.xlu0 %v189, 64
    %v558 = vpop.permute.xlu0 %557
    %v561 = vsel %vm200, %v446, 0
    %563 = vmatpush.msra.mxu0 0.0
    %564 = vmatpush.msra.mxu0 0.0
    %565 = vmatpush.msra.mxu0 0.0
    %566 = vmatpush.msra.mxu0 0.0
    %567 = vmatpush.msra.mxu0 0.0
    %568 = vmatpush.msra.mxu0 0.0
    %569 = vmatpush.msra.mxu0 0.0
    %570 = vmatpush.msra.mxu0 0.0
    %571 = vmatpush.msra.mxu0 0.0
    %572 = vmatpush.msra.mxu0 0.0
    %573 = vmatpush.msra.mxu0 0.0
    %574 = vmatpush.msra.mxu0 0.0
    %575 = vmatpush.msra.mxu0 0.0
    %576 = vmatpush.msra.mxu0 0.0
    %577 = vmatpush.msra.mxu0 0.0
    %578 = vmatpush.msra.mxu0 %v558
    %579 = vmatmul.f32.gmra.mxu0 %v561
    %v580 = vpop.f32.mrf.mxu0
    %v581 = vadd.f32 0.0, %v580
    %582 = vdwg.mxu0
    %583 = vrot.lane.b32.xlu0 %v191, 64
    %v584 = vpop.permute.xlu0 %583
    %v587 = vsel %vm200, %v448, 0
    %589 = vmatpush.msra.mxu0 0.0
    %590 = vmatpush.msra.mxu0 0.0
    %591 = vmatpush.msra.mxu0 0.0
    %592 = vmatpush.msra.mxu0 0.0
    %593 = vmatpush.msra.mxu0 0.0
    %594 = vmatpush.msra.mxu0 0.0
    %595 = vmatpush.msra.mxu0 0.0
    %596 = vmatpush.msra.mxu0 0.0
    %597 = vmatpush.msra.mxu0 0.0
    %598 = vmatpush.msra.mxu0 0.0
    %599 = vmatpush.msra.mxu0 0.0
    %600 = vmatpush.msra.mxu0 0.0
    %601 = vmatpush.msra.mxu0 0.0
    %602 = vmatpush.msra.mxu0 0.0
    %603 = vmatpush.msra.mxu0 0.0
    %604 = vmatpush.msra.mxu0 %v584
    %605 = vmatmul.f32.gmra.mxu0 %v587
    %v606 = vpop.f32.mrf.mxu0
    %v607 = vadd.f32 0.0, %v606
    %608 = vdwg.mxu0
    %609 = vrot.lane.b32.xlu0 %v193, 64
    %v610 = vpop.permute.xlu0 %609
    %v613 = vsel %vm200, %v450, 0
    %615 = vmatpush.msra.mxu0 0.0
    %616 = vmatpush.msra.mxu0 0.0
    %617 = vmatpush.msra.mxu0 0.0
    %618 = vmatpush.msra.mxu0 0.0
    %619 = vmatpush.msra.mxu0 0.0
    %620 = vmatpush.msra.mxu0 0.0
    %621 = vmatpush.msra.mxu0 0.0
    %622 = vmatpush.msra.mxu0 0.0
    %623 = vmatpush.msra.mxu0 0.0
    %624 = vmatpush.msra.mxu0 0.0
    %625 = vmatpush.msra.mxu0 0.0
    %626 = vmatpush.msra.mxu0 0.0
    %627 = vmatpush.msra.mxu0 0.0
    %628 = vmatpush.msra.mxu0 0.0
    %629 = vmatpush.msra.mxu0 0.0
    %630 = vmatpush.msra.mxu0 %v610
    %631 = vmatmul.f32.gmra.mxu0 %v613
    %v632 = vpop.f32.mrf.mxu0
    %v633 = vadd.f32 0.0, %v632
    %634 = vdwg.mxu0
    %635 = vrot.lane.b32.xlu0 %v195, 64
    %v636 = vpop.permute.xlu0 %635
    %v639 = vsel %vm200, %v452, 0
    %641 = vmatpush.msra.mxu0 0.0
    %642 = vmatpush.msra.mxu0 0.0
    %643 = vmatpush.msra.mxu0 0.0
    %644 = vmatpush.msra.mxu0 0.0
    %645 = vmatpush.msra.mxu0 0.0
    %646 = vmatpush.msra.mxu0 0.0
    %647 = vmatpush.msra.mxu0 0.0
    %648 = vmatpush.msra.mxu0 0.0
    %649 = vmatpush.msra.mxu0 0.0
    %650 = vmatpush.msra.mxu0 0.0
    %651 = vmatpush.msra.mxu0 0.0
    %652 = vmatpush.msra.mxu0 0.0
    %653 = vmatpush.msra.mxu0 0.0
    %654 = vmatpush.msra.mxu0 0.0
    %655 = vmatpush.msra.mxu0 0.0
    %656 = vmatpush.msra.mxu0 %v636
    %657 = vmatmul.f32.gmra.mxu0 %v639
    %v658 = vpop.f32.mrf.mxu0
    %v659 = vadd.f32 0.0, %v658
    %660 = vdwg.mxu0
    %661 = vrot.lane.b32.xlu0 %v197, 64
    %v662 = vpop.permute.xlu0 %661
    %v665 = vsel %vm200, %v454, 0
    %667 = vmatpush.msra.mxu0 0.0
    %668 = vmatpush.msra.mxu0 0.0
    %669 = vmatpush.msra.mxu0 0.0
    %670 = vmatpush.msra.mxu0 0.0
    %671 = vmatpush.msra.mxu0 0.0
    %672 = vmatpush.msra.mxu0 0.0
    %673 = vmatpush.msra.mxu0 0.0
    %674 = vmatpush.msra.mxu0 0.0
    %675 = vmatpush.msra.mxu0 0.0
    %676 = vmatpush.msra.mxu0 0.0
    %677 = vmatpush.msra.mxu0 0.0
    %678 = vmatpush.msra.mxu0 0.0
    %679 = vmatpush.msra.mxu0 0.0
    %680 = vmatpush.msra.mxu0 0.0
    %681 = vmatpush.msra.mxu0 0.0
    %682 = vmatpush.msra.mxu0 %v662
    %683 = vmatmul.f32.gmra.mxu0 %v665
    %v684 = vpop.f32.mrf.mxu0
    %v685 = vadd.f32 0.0, %v684
    %686 = vdwg.mxu0
    %v687 = vrcp.pop %v457
    %v688 = vmul.f32 %v457, %v687
    %v689 = vsub.f32 1.0, %v688
    %v690 = vmul.f32 %v687, %v689
    %v691 = vadd.f32 %v687, %v690
    %vm692 = vweird.f32 %v457
    %vm693 = vweird.f32 %v687
    %vm694 = vmor %vm692, %vm693
    %v695 = vsel %vm694, %v687, %v691
    %v696 = vand.u32 2147483647, %v457
    %vm697 = vcmp.eq.f32.partialorder %v696, 8.507059e+37
    %v698 = vand.u32 %v457, 2147483648
    %v699 = vor.u32 1.1754944e-38, %v698
    %v700 = vsel %vm697, %v699, %v695
    %v701 = vmul.f32 1.0, %v700
    %v702 = vrcp.pop %v460
    %v703 = vmul.f32 %v460, %v702
    %v704 = vsub.f32 1.0, %v703
    %v705 = vmul.f32 %v702, %v704
    %v706 = vadd.f32 %v702, %v705
    %vm707 = vweird.f32 %v460
    %vm708 = vweird.f32 %v702
    %vm709 = vmor %vm707, %vm708
    %v710 = vsel %vm709, %v702, %v706
    %v711 = vand.u32 2147483647, %v460
    %vm712 = vcmp.eq.f32.partialorder %v711, 8.507059e+37
    %v713 = vand.u32 %v460, 2147483648
    %v714 = vor.u32 1.1754944e-38, %v713
    %v715 = vsel %vm712, %v714, %v710
    %v716 = vmul.f32 1.0, %v715
    %v717 = vrcp.pop %v463
    %v718 = vmul.f32 %v463, %v717
    %v719 = vsub.f32 1.0, %v718
    %v720 = vmul.f32 %v717, %v719
    %v721 = vadd.f32 %v717, %v720
    %vm722 = vweird.f32 %v463
    %vm723 = vweird.f32 %v717
    %vm724 = vmor %vm722, %vm723
    %v725 = vsel %vm724, %v717, %v721
    %v726 = vand.u32 2147483647, %v463
    %vm727 = vcmp.eq.f32.partialorder %v726, 8.507059e+37
    %v728 = vand.u32 %v463, 2147483648
    %v729 = vor.u32 1.1754944e-38, %v728
    %v730 = vsel %vm727, %v729, %v725
    %v731 = vmul.f32 1.0, %v730
    %v732 = vrcp.pop %v466
    %v733 = vmul.f32 %v466, %v732
    %v734 = vsub.f32 1.0, %v733
    %v735 = vmul.f32 %v732, %v734
    %v736 = vadd.f32 %v732, %v735
    %vm737 = vweird.f32 %v466
    %vm738 = vweird.f32 %v732
    %vm739 = vmor %vm737, %vm738
    %v740 = vsel %vm739, %v732, %v736
    %v741 = vand.u32 2147483647, %v466
    %vm742 = vcmp.eq.f32.partialorder %v741, 8.507059e+37
    %v743 = vand.u32 %v466, 2147483648
    %v744 = vor.u32 1.1754944e-38, %v743
    %v745 = vsel %vm742, %v744, %v740
    %v746 = vmul.f32 1.0, %v745
    %v747 = vrcp.pop %v469
    %v748 = vmul.f32 %v469, %v747
    %v749 = vsub.f32 1.0, %v748
    %v750 = vmul.f32 %v747, %v749
    %v751 = vadd.f32 %v747, %v750
    %vm752 = vweird.f32 %v469
    %vm753 = vweird.f32 %v747
    %vm754 = vmor %vm752, %vm753
    %v755 = vsel %vm754, %v747, %v751
    %v756 = vand.u32 2147483647, %v469
    %vm757 = vcmp.eq.f32.partialorder %v756, 8.507059e+37
    %v758 = vand.u32 %v469, 2147483648
    %v759 = vor.u32 1.1754944e-38, %v758
    %v760 = vsel %vm757, %v759, %v755
    %v761 = vmul.f32 1.0, %v760
    %v762 = vrcp.pop %v472
    %v763 = vmul.f32 %v472, %v762
    %v764 = vsub.f32 1.0, %v763
    %v765 = vmul.f32 %v762, %v764
    %v766 = vadd.f32 %v762, %v765
    %vm767 = vweird.f32 %v472
    %vm768 = vweird.f32 %v762
    %vm769 = vmor %vm767, %vm768
    %v770 = vsel %vm769, %v762, %v766
    %v771 = vand.u32 2147483647, %v472
    %vm772 = vcmp.eq.f32.partialorder %v771, 8.507059e+37
    %v773 = vand.u32 %v472, 2147483648
    %v774 = vor.u32 1.1754944e-38, %v773
    %v775 = vsel %vm772, %v774, %v770
    %v776 = vmul.f32 1.0, %v775
    %v777 = vrcp.pop %v475
    %v778 = vmul.f32 %v475, %v777
    %v779 = vsub.f32 1.0, %v778
    %v780 = vmul.f32 %v777, %v779
    %v781 = vadd.f32 %v777, %v780
    %vm782 = vweird.f32 %v475
    %vm783 = vweird.f32 %v777
    %vm784 = vmor %vm782, %vm783
    %v785 = vsel %vm784, %v777, %v781
    %v786 = vand.u32 2147483647, %v475
    %vm787 = vcmp.eq.f32.partialorder %v786, 8.507059e+37
    %v788 = vand.u32 %v475, 2147483648
    %v789 = vor.u32 1.1754944e-38, %v788
    %v790 = vsel %vm787, %v789, %v785
    %v791 = vmul.f32 1.0, %v790
    %v792 = vrcp.pop %v478
    %v793 = vmul.f32 %v478, %v792
    %v794 = vsub.f32 1.0, %v793
    %v795 = vmul.f32 %v792, %v794
    %v796 = vadd.f32 %v792, %v795
    %vm797 = vweird.f32 %v478
    %vm798 = vweird.f32 %v792
    %vm799 = vmor %vm797, %vm798
    %v800 = vsel %vm799, %v792, %v796
    %v801 = vand.u32 2147483647, %v478
    %vm802 = vcmp.eq.f32.partialorder %v801, 8.507059e+37
    %v803 = vand.u32 %v478, 2147483648
    %v804 = vor.u32 1.1754944e-38, %v803
    %v805 = vsel %vm802, %v804, %v800
    %v806 = vmul.f32 1.0, %v805
    %v807 = vmul.f32 %v503, %v701
    %v808 = vmul.f32 %v529, %v716
    %v809 = vmul.f32 %v555, %v731
    %v810 = vmul.f32 %v581, %v746
    %v811 = vmul.f32 %v607, %v761
    %v812 = vmul.f32 %v633, %v776
    %v813 = vmul.f32 %v659, %v791
    %v814 = vmul.f32 %v685, %v806
    %817 = vrot.lane.b32.xlu0 %v809, 8
    %v818 = vpop.permute.xlu0 %817
    %819 = vrot.lane.b32.xlu0 %v810, 8
    %v820 = vpop.permute.xlu0 %819
    %825 = vrot.lane.b32.xlu0 %v811, 16
    %v826 = vpop.permute.xlu0 %825
    %827 = vrot.lane.b32.xlu0 %v812, 16
    %v828 = vpop.permute.xlu0 %827
    %833 = vrot.lane.b32.xlu0 %v813, 24
    %v834 = vpop.permute.xlu0 %833
    %835 = vrot.lane.b32.xlu0 %v814, 24
    %v836 = vpop.permute.xlu0 %835
    %v839 = vsel %vm200, %v807, %v818
    %v840 = vsel %vm200, %v808, %v820
    %vm841 = vcmask 130048
    %v842 = vsel %vm841, %v839, %v826
    %v843 = vsel %vm841, %v840, %v828
    %vm844 = vcmask 195584
    %v845 = vsel %vm844, %v842, %v834
    %v846 = vsel %vm844, %v843, %v836
    %v848 = vsel %vm107, %v845, 0
    %v851 = vsel %vm107, %v846, 0
    %853 = vmatpush.msra.mxu0 0.0
    %854 = vmatpush.msra.mxu0 0.0
    %855 = vmatpush.msra.mxu0 0.0
    %856 = vmatpush.msra.mxu0 0.0
    %857 = vmatpush.msra.mxu0 0.0
    %858 = vmatpush.msra.mxu0 0.0
    %859 = vmatpush.msra.mxu0 0.0
    %860 = vmatpush.msra.mxu0 0.0
    %861 = vmatpush.msra.mxu0 0.0
    %862 = vmatpush.msra.mxu0 0.0
    %863 = vmatpush.msra.mxu0 0.0
    %864 = vmatpush.msra.mxu0 0.0
    %865 = vmatpush.msra.mxu0 %v78
    %866 = vmatpush.msra.mxu0 %v76
    %867 = vmatpush.msra.mxu0 %v74
    %868 = vmatpush.msra.mxu0 %v72
    %869 = vmatmul.f32.gmra.mxu0 %v848
    %v870 = vpop.f32.mrf.mxu0
    %v871 = vadd.f32 0.0, %v870
    %872 = vmatmul.f32.gmra.mxu0 %v851
    %v873 = vpop.f32.mrf.mxu0
    %v874 = vadd.f32 0.0, %v873
    %875 = vdwg.mxu0
    %v876 = vperm.slane %v103, 3
    %878 = vrot.lane.b32.xlu0 %v876, 64
    %v879 = vpop.permute.xlu0 %878
    %v881 = vadd.f32 %v871, %v879
    %v882 = vadd.f32 %v874, %v879
    %885 = vrot.lane.b32.xlu0 %v881, 64
    %v886 = vpop.permute.xlu0 %885
    %887 = vrot.lane.b32.xlu0 %v882, 64
    %v888 = vpop.permute.xlu0 %887
    %v891 = vadd.f32 %v63, %v886
    %v892 = vadd.f32 %v64, %v888
    %v893 = vsel %vm107, %v891, 0.0
    %894 = vadd.xlane.f32.xlu0 %v893
    %v895 = vpop.xlane.xlu0 %894
    %v896 = vsel %vm107, %v892, 0.0
    %897 = vadd.xlane.f32.xlu0 %v896
    %v898 = vpop.xlane.xlu0 %897
    %v899 = vrcp.pop 32.0
    %v900 = vmul.f32 32.0, %v899
    %v901 = vsub.f32 1.0, %v900
    %v902 = vmul.f32 %v899, %v901
    %v903 = vadd.f32 %v899, %v902
    %vm904 = vweird.f32 %v899
    %v905 = vsel %vm904, %v899, %v903
    %v906 = vmul.f32 %v895, %v905
    %v907 = vmul.f32 %v898, %v905
    %v908 = vsub.f32 %v891, %v906
    %v909 = vsub.f32 %v892, %v907
    %v910 = vmul.f32 %v908, %v908
    %v911 = vmul.f32 %v909, %v909
    %v912 = vsel %vm107, %v910, 0.0
    %913 = vadd.xlane.f32.xlu0 %v912
    %v914 = vpop.xlane.xlu0 %913
    %v915 = vsel %vm107, %v911, 0.0
    %916 = vadd.xlane.f32.xlu0 %v915
    %v917 = vpop.xlane.xlu0 %916
    %v918 = vmul.f32 %v914, %v905
    %v919 = vmul.f32 %v917, %v905
    %v920 = vadd.f32 %v918, 1e-05
    %v921 = vadd.f32 %v919, 1e-05
    %v922 = vrsqrt.pop %v920
    %v923 = vmul.f32 %v922, %v920
    %v924 = vmul.f32 %v923, %v922
    %v925 = vmul.f32 0.5, %v924
    %v926 = vsub.f32 1.5, %v925
    %v927 = vmul.f32 %v922, %v926
    %vm928 = vweird.f32 %v920
    %vm929 = vweird.f32 %v922
    %vm930 = vmor %vm928, %vm929
    %v931 = vsel %vm930, %v922, %v927
    %v932 = vrsqrt.pop %v921
    %v933 = vmul.f32 %v932, %v921
    %v934 = vmul.f32 %v933, %v932
    %v935 = vmul.f32 0.5, %v934
    %v936 = vsub.f32 1.5, %v935
    %v937 = vmul.f32 %v932, %v936
    %vm938 = vweird.f32 %v921
    %vm939 = vweird.f32 %v932
    %vm940 = vmor %vm938, %vm939
    %v941 = vsel %vm940, %v932, %v937
    %v942 = vmul.f32 %v908, %v931
    %v943 = vmul.f32 %v909, %v941
    %v944 = vperm.slane %v104, 2
    %v945 = vmul.f32 %v942, %v944
    %v946 = vmul.f32 %v943, %v944
    %v947 = vperm.slane %v104, 3
    %v948 = vadd.f32 %v945, %v947
    %v949 = vadd.f32 %v946, %v947
    %v950 = vperm.slane %v106, 0
    %v952 = vsel %vm107, %v948, 0
    %v955 = vsel %vm107, %v949, 0
    %957 = vmatpush.msra.mxu0 0.0
    %958 = vmatpush.msra.mxu0 0.0
    %959 = vmatpush.msra.mxu0 0.0
    %960 = vmatpush.msra.mxu0 0.0
    %961 = vmatpush.msra.mxu0 0.0
    %962 = vmatpush.msra.mxu0 0.0
    %963 = vmatpush.msra.mxu0 0.0
    %964 = vmatpush.msra.mxu0 0.0
    %965 = vmatpush.msra.mxu0 0.0
    %966 = vmatpush.msra.mxu0 0.0
    %967 = vmatpush.msra.mxu0 0.0
    %968 = vmatpush.msra.mxu0 0.0
    %969 = vmatpush.msra.mxu0 %v82
    %970 = vmatpush.msra.mxu0 %v81
    %971 = vmatpush.msra.mxu0 %v80
    %972 = vmatpush.msra.mxu0 %v79
    %973 = vmatmul.f32.gmra.mxu0 %v952
    %v974 = vpop.f32.mrf.mxu0
    %v975 = vadd.f32 %v950, %v974
    %976 = vmatmul.f32.gmra.mxu0 %v955
    %v977 = vpop.f32.mrf.mxu0
    %v978 = vadd.f32 %v950, %v977
    %979 = vdwg.mxu0
    %v980 = vmax.f32 %v975, 0.0
    %v981 = vmax.f32 %v978, 0.0
    %v982 = vperm.slane %v104, 0
    %vm983 = vcmask 523264
    %v985 = vsel %vm983, %v980, 0
    %v988 = vsel %vm983, %v981, 0
    %990 = vmatpush.msra.mxu0 0.0
    %991 = vmatpush.msra.mxu0 0.0
    %992 = vmatpush.msra.mxu0 0.0
    %993 = vmatpush.msra.mxu0 0.0
    %994 = vmatpush.msra.mxu0 0.0
    %995 = vmatpush.msra.mxu0 0.0
    %996 = vmatpush.msra.mxu0 0.0
    %997 = vmatpush.msra.mxu0 0.0
    %998 = vmatpush.msra.mxu0 %v94
    %999 = vmatpush.msra.mxu0 %v93
    %1000 = vmatpush.msra.mxu0 %v92
    %1001 = vmatpush.msra.mxu0 %v91
    %1002 = vmatpush.msra.mxu0 %v90
    %1003 = vmatpush.msra.mxu0 %v89
    %1004 = vmatpush.msra.mxu0 %v88
    %1005 = vmatpush.msra.mxu0 %v87
    %1006 = vmatmul.f32.gmra.mxu0 %v985
    %v1007 = vpop.f32.mrf.mxu0
    %v1008 = vadd.f32 %v982, %v1007
    %1009 = vmatmul.f32.gmra.mxu0 %v988
    %v1010 = vpop.f32.mrf.mxu0
    %v1011 = vadd.f32 %v982, %v1010
    %1012 = vdwg.mxu0
    %v1013 = vadd.f32 %v948, %v1008
    %v1014 = vadd.f32 %v949, %v1011
    %v1015 = vsel %vm107, %v1013, 0.0
    %1016 = vadd.xlane.f32.xlu0 %v1015
    %v1017 = vpop.xlane.xlu0 %1016
    %v1018 = vsel %vm107, %v1014, 0.0
    %1019 = vadd.xlane.f32.xlu0 %v1018
    %v1020 = vpop.xlane.xlu0 %1019
    %v1021 = vmul.f32 %v1017, %v905
    %v1022 = vmul.f32 %v1020, %v905
    %v1023 = vsub.f32 %v1013, %v1021
    %v1024 = vsub.f32 %v1014, %v1022
    %v1025 = vmul.f32 %v1023, %v1023
    %v1026 = vmul.f32 %v1024, %v1024
    %v1027 = vsel %vm107, %v1025, 0.0
    %1028 = vadd.xlane.f32.xlu0 %v1027
    %v1029 = vpop.xlane.xlu0 %1028
    %v1030 = vsel %vm107, %v1026, 0.0
    %1031 = vadd.xlane.f32.xlu0 %v1030
    %v1032 = vpop.xlane.xlu0 %1031
    %v1033 = vmul.f32 %v1029, %v905
    %v1034 = vmul.f32 %v1032, %v905
    %v1035 = vadd.f32 %v1033, 1e-05
    %v1036 = vadd.f32 %v1034, 1e-05
    %v1037 = vrsqrt.pop %v1035
    %v1038 = vmul.f32 %v1037, %v1035
    %v1039 = vmul.f32 %v1038, %v1037
    %v1040 = vmul.f32 0.5, %v1039
    %v1041 = vsub.f32 1.5, %v1040
    %v1042 = vmul.f32 %v1037, %v1041
    %vm1043 = vweird.f32 %v1035
    %vm1044 = vweird.f32 %v1037
    %vm1045 = vmor %vm1043, %vm1044
    %v1046 = vsel %vm1045, %v1037, %v1042
    %v1047 = vrsqrt.pop %v1036
    %v1048 = vmul.f32 %v1047, %v1036
    %v1049 = vmul.f32 %v1048, %v1047
    %v1050 = vmul.f32 0.5, %v1049
    %v1051 = vsub.f32 1.5, %v1050
    %v1052 = vmul.f32 %v1047, %v1051
    %vm1053 = vweird.f32 %v1036
    %vm1054 = vweird.f32 %v1047
    %vm1055 = vmor %vm1053, %vm1054
    %v1056 = vsel %vm1055, %v1047, %v1052
    %v1057 = vmul.f32 %v1023, %v1046
    %v1058 = vmul.f32 %v1024, %v1056
    %v1059 = vperm.slane %v104, 4
    %v1060 = vmul.f32 %v1057, %v1059
    %v1061 = vmul.f32 %v1058, %v1059
    %v1062 = vperm.slane %v104, 5
    %v1063 = vadd.f32 %v1060, %v1062
    %v1064 = vadd.f32 %v1061, %v1062
    %v1066 = vsel %vm107, %v1063, 0
    %v1069 = vsel %vm107, %v1064, 0
    %1071 = vmatpush.msra.mxu0 0.0
    %1072 = vmatpush.msra.mxu0 0.0
    %1073 = vmatpush.msra.mxu0 0.0
    %1074 = vmatpush.msra.mxu0 0.0
    %1075 = vmatpush.msra.mxu0 0.0
    %1076 = vmatpush.msra.mxu0 0.0
    %1077 = vmatpush.msra.mxu0 0.0
    %1078 = vmatpush.msra.mxu0 0.0
    %1079 = vmatpush.msra.mxu0 0.0
    %1080 = vmatpush.msra.mxu0 0.0
    %1081 = vmatpush.msra.mxu0 0.0
    %1082 = vmatpush.msra.mxu0 0.0
    %1083 = vmatpush.msra.mxu0 %v77
    %1084 = vmatpush.msra.mxu0 %v75
    %1085 = vmatpush.msra.mxu0 %v73
    %1086 = vmatpush.msra.mxu0 %v71
    %1087 = vmatmul.f32.gmra.mxu0 %v1066
    %v1088 = vpop.f32.mrf.mxu0
    %v1089 = vadd.f32 0.0, %v1088
    %1090 = vmatmul.f32.gmra.mxu0 %v1069
    %v1091 = vpop.f32.mrf.mxu0
    %v1092 = vadd.f32 0.0, %v1091
    %1093 = vdwg.mxu0
    %v1094 = vperm.slane %v103, 4
    %1096 = vrot.lane.b32.xlu0 %v1094, 96
    %v1097 = vpop.permute.xlu0 %1096
    %v1099 = vadd.f32 %v1089, %v1097
    %v1100 = vadd.f32 %v1092, %v1097
    %v1101 = vmul.f32 %v1099, 0.17677669
    %v1102 = vmul.f32 %v1100, 0.17677669
    %v1104 = vsel %vm107, %v65, 0
    %v1107 = vsel %vm107, %v66, 0
    %v1110 = vsel %vm107, %v67, 0
    %v1113 = vsel %vm107, %v68, 0
    %1115 = vmatpush.msra.mxu0 0.0
    %1116 = vmatpush.msra.mxu0 0.0
    %1117 = vmatpush.msra.mxu0 0.0
    %1118 = vmatpush.msra.mxu0 0.0
    %1119 = vmatpush.msra.mxu0 0.0
    %1120 = vmatpush.msra.mxu0 0.0
    %1121 = vmatpush.msra.mxu0 0.0
    %1122 = vmatpush.msra.mxu0 0.0
    %1123 = vmatpush.msra.mxu0 0.0
    %1124 = vmatpush.msra.mxu0 0.0
    %1125 = vmatpush.msra.mxu0 0.0
    %1126 = vmatpush.msra.mxu0 0.0
    %1127 = vmatpush.msra.mxu0 %v78
    %1128 = vmatpush.msra.mxu0 %v76
    %1129 = vmatpush.msra.mxu0 %v74
    %1130 = vmatpush.msra.mxu0 %v72
    %1131 = vmatmul.f32.gmra.mxu0 %v1104
    %v1132 = vpop.f32.mrf.mxu0
    %v1133 = vadd.f32 0.0, %v1132
    %1134 = vmatmul.f32.gmra.mxu0 %v1107
    %v1135 = vpop.f32.mrf.mxu0
    %v1136 = vadd.f32 0.0, %v1135
    %1137 = vmatmul.f32.gmra.mxu0 %v1110
    %v1138 = vpop.f32.mrf.mxu0
    %v1139 = vadd.f32 0.0, %v1138
    %1140 = vmatmul.f32.gmra.mxu0 %v1113
    %v1141 = vpop.f32.mrf.mxu0
    %v1142 = vadd.f32 0.0, %v1141
    %1143 = vdwg.mxu0
    %v1144 = vperm.slane %v103, 5
    %v1145 = vadd.f32 %v1133, %v1144
    %v1146 = vadd.f32 %v1136, %v1144
    %v1147 = vadd.f32 %v1139, %v1144
    %v1148 = vadd.f32 %v1142, %v1144
    %v1149 = vperm.slane %v103, 6
    %1151 = vrot.lane.b32.xlu0 %v1149, 32
    %v1152 = vpop.permute.xlu0 %1151
    %v1154 = vadd.f32 %v1133, %v1152
    %v1155 = vadd.f32 %v1136, %v1152
    %v1156 = vadd.f32 %v1139, %v1152
    %v1157 = vadd.f32 %v1142, %v1152
    %1160 = vrot.lane.b32.xlu0 %v1101, 120
    %v1161 = vpop.permute.xlu0 %1160
    %1162 = vrot.lane.b32.xlu0 %v1102, 120
    %v1163 = vpop.permute.xlu0 %1162
    %1164 = vrot.lane.b32.xlu0 %v1101, 112
    %v1165 = vpop.permute.xlu0 %1164
    %1166 = vrot.lane.b32.xlu0 %v1102, 112
    %v1167 = vpop.permute.xlu0 %1166
    %1168 = vrot.lane.b32.xlu0 %v1101, 104
    %v1169 = vpop.permute.xlu0 %1168
    %1170 = vrot.lane.b32.xlu0 %v1102, 104
    %v1171 = vpop.permute.xlu0 %1170
    %1176 = vrot.lane.b32.xlu0 %v1145, 120
    %v1177 = vpop.permute.xlu0 %1176
    %1178 = vrot.lane.b32.xlu0 %v1146, 120
    %v1179 = vpop.permute.xlu0 %1178
    %1180 = vrot.lane.b32.xlu0 %v1147, 120
    %v1181 = vpop.permute.xlu0 %1180
    %1182 = vrot.lane.b32.xlu0 %v1148, 120
    %v1183 = vpop.permute.xlu0 %1182
    %1184 = vrot.lane.b32.xlu0 %v1145, 112
    %v1185 = vpop.permute.xlu0 %1184
    %1186 = vrot.lane.b32.xlu0 %v1146, 112
    %v1187 = vpop.permute.xlu0 %1186
    %1188 = vrot.lane.b32.xlu0 %v1147, 112
    %v1189 = vpop.permute.xlu0 %1188
    %1190 = vrot.lane.b32.xlu0 %v1148, 112
    %v1191 = vpop.permute.xlu0 %1190
    %1192 = vrot.lane.b32.xlu0 %v1145, 104
    %v1193 = vpop.permute.xlu0 %1192
    %1194 = vrot.lane.b32.xlu0 %v1146, 104
    %v1195 = vpop.permute.xlu0 %1194
    %1196 = vrot.lane.b32.xlu0 %v1147, 104
    %v1197 = vpop.permute.xlu0 %1196
    %1198 = vrot.lane.b32.xlu0 %v1148, 104
    %v1199 = vpop.permute.xlu0 %1198
    %1204 = vrot.lane.b32.xlu0 %v1154, 120
    %v1205 = vpop.permute.xlu0 %1204
    %1206 = vrot.lane.b32.xlu0 %v1155, 120
    %v1207 = vpop.permute.xlu0 %1206
    %1208 = vrot.lane.b32.xlu0 %v1156, 120
    %v1209 = vpop.permute.xlu0 %1208
    %1210 = vrot.lane.b32.xlu0 %v1157, 120
    %v1211 = vpop.permute.xlu0 %1210
    %1212 = vrot.lane.b32.xlu0 %v1154, 112
    %v1213 = vpop.permute.xlu0 %1212
    %1214 = vrot.lane.b32.xlu0 %v1155, 112
    %v1215 = vpop.permute.xlu0 %1214
    %1216 = vrot.lane.b32.xlu0 %v1156, 112
    %v1217 = vpop.permute.xlu0 %1216
    %1218 = vrot.lane.b32.xlu0 %v1157, 112
    %v1219 = vpop.permute.xlu0 %1218
    %1220 = vrot.lane.b32.xlu0 %v1154, 104
    %v1221 = vpop.permute.xlu0 %1220
    %1222 = vrot.lane.b32.xlu0 %v1155, 104
    %v1223 = vpop.permute.xlu0 %1222
    %1224 = vrot.lane.b32.xlu0 %v1156, 104
    %v1225 = vpop.permute.xlu0 %1224
    %1226 = vrot.lane.b32.xlu0 %v1157, 104
    %v1227 = vpop.permute.xlu0 %1226
    %1228 = vrot.lane.b32.xlu0 %v1101, 32
    %v1229 = vpop.permute.xlu0 %1228
    %v1230 = vsel %vm200, %v1229, 0
    %v1232 = vsel %vm200, %v1145, 0
    %v1234 = vsel %vm200, %v1146, 0
    %1236 = vmatpush.xpose.msra.mxu0 0.0
    %1237 = vmatpush.xpose.msra.mxu0 0.0
    %1238 = vmatpush.xpose.msra.mxu0 0.0
    %1239 = vmatpush.xpose.msra.mxu0 0.0
    %1240 = vmatpush.xpose.msra.mxu0 0.0
    %1241 = vmatpush.xpose.msra.mxu0 0.0
    %1242 = vmatpush.xpose.msra.mxu0 0.0
    %1243 = vmatpush.xpose.msra.mxu0 0.0
    %1244 = vmatpush.xpose.msra.mxu0 0.0
    %1245 = vmatpush.xpose.msra.mxu0 0.0
    %1246 = vmatpush.xpose.msra.mxu0 0.0
    %1247 = vmatpush.xpose.msra.mxu0 0.0
    %1248 = vmatpush.xpose.msra.mxu0 0.0
    %1249 = vmatpush.xpose.msra.mxu0 0.0
    %1250 = vmatpush.xpose.msra.mxu0 %v1234
    %1251 = vmatpush.xpose.msra.mxu0 %v1232
    %1252 = vmatmul.f32.gmra.mxu0 %v1230
    %v1253 = vpop.f32.mrf.mxu0
    %v1254 = vadd.f32 %v70, %v1253
    %1255 = vdwg.mxu0
    %1256 = vrot.lane.b32.xlu0 %v1102, 32
    %v1257 = vpop.permute.xlu0 %1256
    %v1258 = vsel %vm200, %v1257, 0
    %v1260 = vsel %vm200, %v1147, 0
    %v1262 = vsel %vm200, %v1148, 0
    %1264 = vmatpush.xpose.msra.mxu0 0.0
    %1265 = vmatpush.xpose.msra.mxu0 0.0
    %1266 = vmatpush.xpose.msra.mxu0 0.0
    %1267 = vmatpush.xpose.msra.mxu0 0.0
    %1268 = vmatpush.xpose.msra.mxu0 0.0
    %1269 = vmatpush.xpose.msra.mxu0 0.0
    %1270 = vmatpush.xpose.msra.mxu0 0.0
    %1271 = vmatpush.xpose.msra.mxu0 0.0
    %1272 = vmatpush.xpose.msra.mxu0 0.0
    %1273 = vmatpush.xpose.msra.mxu0 0.0
    %1274 = vmatpush.xpose.msra.mxu0 0.0
    %1275 = vmatpush.xpose.msra.mxu0 0.0
    %1276 = vmatpush.xpose.msra.mxu0 0.0
    %1277 = vmatpush.xpose.msra.mxu0 0.0
    %1278 = vmatpush.xpose.msra.mxu0 %v1262
    %1279 = vmatpush.xpose.msra.mxu0 %v1260
    %1280 = vmatmul.f32.gmra.mxu0 %v1258
    %v1281 = vpop.f32.mrf.mxu0
    %v1282 = vadd.f32 %v70, %v1281
    %1283 = vdwg.mxu0
    %1284 = vrot.lane.b32.xlu0 %v1161, 32
    %v1285 = vpop.permute.xlu0 %1284
    %v1286 = vsel %vm200, %v1285, 0
    %v1288 = vsel %vm200, %v1177, 0
    %v1290 = vsel %vm200, %v1179, 0
    %1292 = vmatpush.xpose.msra.mxu0 0.0
    %1293 = vmatpush.xpose.msra.mxu0 0.0
    %1294 = vmatpush.xpose.msra.mxu0 0.0
    %1295 = vmatpush.xpose.msra.mxu0 0.0
    %1296 = vmatpush.xpose.msra.mxu0 0.0
    %1297 = vmatpush.xpose.msra.mxu0 0.0
    %1298 = vmatpush.xpose.msra.mxu0 0.0
    %1299 = vmatpush.xpose.msra.mxu0 0.0
    %1300 = vmatpush.xpose.msra.mxu0 0.0
    %1301 = vmatpush.xpose.msra.mxu0 0.0
    %1302 = vmatpush.xpose.msra.mxu0 0.0
    %1303 = vmatpush.xpose.msra.mxu0 0.0
    %1304 = vmatpush.xpose.msra.mxu0 0.0
    %1305 = vmatpush.xpose.msra.mxu0 0.0
    %1306 = vmatpush.xpose.msra.mxu0 %v1290
    %1307 = vmatpush.xpose.msra.mxu0 %v1288
    %1308 = vmatmul.f32.gmra.mxu0 %v1286
    %v1309 = vpop.f32.mrf.mxu0
    %v1310 = vadd.f32 %v70, %v1309
    %1311 = vdwg.mxu0
    %1312 = vrot.lane.b32.xlu0 %v1163, 32
    %v1313 = vpop.permute.xlu0 %1312
    %v1314 = vsel %vm200, %v1313, 0
    %v1316 = vsel %vm200, %v1181, 0
    %v1318 = vsel %vm200, %v1183, 0
    %1320 = vmatpush.xpose.msra.mxu0 0.0
    %1321 = vmatpush.xpose.msra.mxu0 0.0
    %1322 = vmatpush.xpose.msra.mxu0 0.0
    %1323 = vmatpush.xpose.msra.mxu0 0.0
    %1324 = vmatpush.xpose.msra.mxu0 0.0
    %1325 = vmatpush.xpose.msra.mxu0 0.0
    %1326 = vmatpush.xpose.msra.mxu0 0.0
    %1327 = vmatpush.xpose.msra.mxu0 0.0
    %1328 = vmatpush.xpose.msra.mxu0 0.0
    %1329 = vmatpush.xpose.msra.mxu0 0.0
    %1330 = vmatpush.xpose.msra.mxu0 0.0
    %1331 = vmatpush.xpose.msra.mxu0 0.0
    %1332 = vmatpush.xpose.msra.mxu0 0.0
    %1333 = vmatpush.xpose.msra.mxu0 0.0
    %1334 = vmatpush.xpose.msra.mxu0 %v1318
    %1335 = vmatpush.xpose.msra.mxu0 %v1316
    %1336 = vmatmul.f32.gmra.mxu0 %v1314
    %v1337 = vpop.f32.mrf.mxu0
    %v1338 = vadd.f32 %v70, %v1337
    %1339 = vdwg.mxu0
    %1340 = vrot.lane.b32.xlu0 %v1165, 32
    %v1341 = vpop.permute.xlu0 %1340
    %v1342 = vsel %vm200, %v1341, 0
    %v1344 = vsel %vm200, %v1185, 0
    %v1346 = vsel %vm200, %v1187, 0
    %1348 = vmatpush.xpose.msra.mxu0 0.0
    %1349 = vmatpush.xpose.msra.mxu0 0.0
    %1350 = vmatpush.xpose.msra.mxu0 0.0
    %1351 = vmatpush.xpose.msra.mxu0 0.0
    %1352 = vmatpush.xpose.msra.mxu0 0.0
    %1353 = vmatpush.xpose.msra.mxu0 0.0
    %1354 = vmatpush.xpose.msra.mxu0 0.0
    %1355 = vmatpush.xpose.msra.mxu0 0.0
    %1356 = vmatpush.xpose.msra.mxu0 0.0
    %1357 = vmatpush.xpose.msra.mxu0 0.0
    %1358 = vmatpush.xpose.msra.mxu0 0.0
    %1359 = vmatpush.xpose.msra.mxu0 0.0
    %1360 = vmatpush.xpose.msra.mxu0 0.0
    %1361 = vmatpush.xpose.msra.mxu0 0.0
    %1362 = vmatpush.xpose.msra.mxu0 %v1346
    %1363 = vmatpush.xpose.msra.mxu0 %v1344
    %1364 = vmatmul.f32.gmra.mxu0 %v1342
    %v1365 = vpop.f32.mrf.mxu0
    %v1366 = vadd.f32 %v70, %v1365
    %1367 = vdwg.mxu0
    %1368 = vrot.lane.b32.xlu0 %v1167, 32
    %v1369 = vpop.permute.xlu0 %1368
    %v1370 = vsel %vm200, %v1369, 0
    %v1372 = vsel %vm200, %v1189, 0
    %v1374 = vsel %vm200, %v1191, 0
    %1376 = vmatpush.xpose.msra.mxu0 0.0
    %1377 = vmatpush.xpose.msra.mxu0 0.0
    %1378 = vmatpush.xpose.msra.mxu0 0.0
    %1379 = vmatpush.xpose.msra.mxu0 0.0
    %1380 = vmatpush.xpose.msra.mxu0 0.0
    %1381 = vmatpush.xpose.msra.mxu0 0.0
    %1382 = vmatpush.xpose.msra.mxu0 0.0
    %1383 = vmatpush.xpose.msra.mxu0 0.0
    %1384 = vmatpush.xpose.msra.mxu0 0.0
    %1385 = vmatpush.xpose.msra.mxu0 0.0
    %1386 = vmatpush.xpose.msra.mxu0 0.0
    %1387 = vmatpush.xpose.msra.mxu0 0.0
    %1388 = vmatpush.xpose.msra.mxu0 0.0
    %1389 = vmatpush.xpose.msra.mxu0 0.0
    %1390 = vmatpush.xpose.msra.mxu0 %v1374
    %1391 = vmatpush.xpose.msra.mxu0 %v1372
    %1392 = vmatmul.f32.gmra.mxu0 %v1370
    %v1393 = vpop.f32.mrf.mxu0
    %v1394 = vadd.f32 %v70, %v1393
    %1395 = vdwg.mxu0
    %1396 = vrot.lane.b32.xlu0 %v1169, 32
    %v1397 = vpop.permute.xlu0 %1396
    %v1398 = vsel %vm200, %v1397, 0
    %v1400 = vsel %vm200, %v1193, 0
    %v1402 = vsel %vm200, %v1195, 0
    %1404 = vmatpush.xpose.msra.mxu0 0.0
    %1405 = vmatpush.xpose.msra.mxu0 0.0
    %1406 = vmatpush.xpose.msra.mxu0 0.0
    %1407 = vmatpush.xpose.msra.mxu0 0.0
    %1408 = vmatpush.xpose.msra.mxu0 0.0
    %1409 = vmatpush.xpose.msra.mxu0 0.0
    %1410 = vmatpush.xpose.msra.mxu0 0.0
    %1411 = vmatpush.xpose.msra.mxu0 0.0
    %1412 = vmatpush.xpose.msra.mxu0 0.0
    %1413 = vmatpush.xpose.msra.mxu0 0.0
    %1414 = vmatpush.xpose.msra.mxu0 0.0
    %1415 = vmatpush.xpose.msra.mxu0 0.0
    %1416 = vmatpush.xpose.msra.mxu0 0.0
    %1417 = vmatpush.xpose.msra.mxu0 0.0
    %1418 = vmatpush.xpose.msra.mxu0 %v1402
    %1419 = vmatpush.xpose.msra.mxu0 %v1400
    %1420 = vmatmul.f32.gmra.mxu0 %v1398
    %v1421 = vpop.f32.mrf.mxu0
    %v1422 = vadd.f32 %v70, %v1421
    %1423 = vdwg.mxu0
    %1424 = vrot.lane.b32.xlu0 %v1171, 32
    %v1425 = vpop.permute.xlu0 %1424
    %v1426 = vsel %vm200, %v1425, 0
    %v1428 = vsel %vm200, %v1197, 0
    %v1430 = vsel %vm200, %v1199, 0
    %1432 = vmatpush.xpose.msra.mxu0 0.0
    %1433 = vmatpush.xpose.msra.mxu0 0.0
    %1434 = vmatpush.xpose.msra.mxu0 0.0
    %1435 = vmatpush.xpose.msra.mxu0 0.0
    %1436 = vmatpush.xpose.msra.mxu0 0.0
    %1437 = vmatpush.xpose.msra.mxu0 0.0
    %1438 = vmatpush.xpose.msra.mxu0 0.0
    %1439 = vmatpush.xpose.msra.mxu0 0.0
    %1440 = vmatpush.xpose.msra.mxu0 0.0
    %1441 = vmatpush.xpose.msra.mxu0 0.0
    %1442 = vmatpush.xpose.msra.mxu0 0.0
    %1443 = vmatpush.xpose.msra.mxu0 0.0
    %1444 = vmatpush.xpose.msra.mxu0 0.0
    %1445 = vmatpush.xpose.msra.mxu0 0.0
    %1446 = vmatpush.xpose.msra.mxu0 %v1430
    %1447 = vmatpush.xpose.msra.mxu0 %v1428
    %1448 = vmatmul.f32.gmra.mxu0 %v1426
    %v1449 = vpop.f32.mrf.mxu0
    %v1450 = vadd.f32 %v70, %v1449
    %1451 = vdwg.mxu0
    %v1452 = vsel %vm841, %v1254, -inf
    %1453 = vmax.xlane.f32.xlu0 %v1452
    %v1454 = vpop.xlane.xlu0 %1453
    %v1455 = vsel %vm841, %v1282, -inf
    %1456 = vmax.xlane.f32.xlu0 %v1455
    %v1457 = vpop.xlane.xlu0 %1456
    %v1458 = vsel %vm841, %v1310, -inf
    %1459 = vmax.xlane.f32.xlu0 %v1458
    %v1460 = vpop.xlane.xlu0 %1459
    %v1461 = vsel %vm841, %v1338, -inf
    %1462 = vmax.xlane.f32.xlu0 %v1461
    %v1463 = vpop.xlane.xlu0 %1462
    %v1464 = vsel %vm841, %v1366, -inf
    %1465 = vmax.xlane.f32.xlu0 %v1464
    %v1466 = vpop.xlane.xlu0 %1465
    %v1467 = vsel %vm841, %v1394, -inf
    %1468 = vmax.xlane.f32.xlu0 %v1467
    %v1469 = vpop.xlane.xlu0 %1468
    %v1470 = vsel %vm841, %v1422, -inf
    %1471 = vmax.xlane.f32.xlu0 %v1470
    %v1472 = vpop.xlane.xlu0 %1471
    %v1473 = vsel %vm841, %v1450, -inf
    %1474 = vmax.xlane.f32.xlu0 %v1473
    %v1475 = vpop.xlane.xlu0 %1474
    %v1476 = vsub.f32 %v1254, %v1454
    %v1477 = vsub.f32 %v1282, %v1457
    %v1478 = vsub.f32 %v1310, %v1460
    %v1479 = vsub.f32 %v1338, %v1463
    %v1480 = vsub.f32 %v1366, %v1466
    %v1481 = vsub.f32 %v1394, %v1469
    %v1482 = vsub.f32 %v1422, %v1472
    %v1483 = vsub.f32 %v1450, %v1475
    %v1484 = vmul.f32 %v1476, 1.442695
    %v1485 = vpow.pop %v1484
    %v1486 = vmul.f32 %v1477, 1.442695
    %v1487 = vpow.pop %v1486
    %v1488 = vmul.f32 %v1478, 1.442695
    %v1489 = vpow.pop %v1488
    %v1490 = vmul.f32 %v1479, 1.442695
    %v1491 = vpow.pop %v1490
    %v1492 = vmul.f32 %v1480, 1.442695
    %v1493 = vpow.pop %v1492
    %v1494 = vmul.f32 %v1481, 1.442695
    %v1495 = vpow.pop %v1494
    %v1496 = vmul.f32 %v1482, 1.442695
    %v1497 = vpow.pop %v1496
    %v1498 = vmul.f32 %v1483, 1.442695
    %v1499 = vpow.pop %v1498
    %v1500 = vsel %vm841, %v1485, 0.0
    %1501 = vadd.xlane.f32.xlu0 %v1500
    %v1502 = vpop.xlane.xlu0 %1501
    %v1503 = vsel %vm841, %v1487, 0.0
    %1504 = vadd.xlane.f32.xlu0 %v1503
    %v1505 = vpop.xlane.xlu0 %1504
    %v1506 = vsel %vm841, %v1489, 0.0
    %1507 = vadd.xlane.f32.xlu0 %v1506
    %v1508 = vpop.xlane.xlu0 %1507
    %v1509 = vsel %vm841, %v1491, 0.0
    %1510 = vadd.xlane.f32.xlu0 %v1509
    %v1511 = vpop.xlane.xlu0 %1510
    %v1512 = vsel %vm841, %v1493, 0.0
    %1513 = vadd.xlane.f32.xlu0 %v1512
    %v1514 = vpop.xlane.xlu0 %1513
    %v1515 = vsel %vm841, %v1495, 0.0
    %1516 = vadd.xlane.f32.xlu0 %v1515
    %v1517 = vpop.xlane.xlu0 %1516
    %v1518 = vsel %vm841, %v1497, 0.0
    %1519 = vadd.xlane.f32.xlu0 %v1518
    %v1520 = vpop.xlane.xlu0 %1519
    %v1521 = vsel %vm841, %v1499, 0.0
    %1522 = vadd.xlane.f32.xlu0 %v1521
    %v1523 = vpop.xlane.xlu0 %1522
    %1524 = vrot.lane.b32.xlu0 %v1154, 96
    %v1525 = vpop.permute.xlu0 %1524
    %1526 = vrot.lane.b32.xlu0 %v1155, 96
    %v1527 = vpop.permute.xlu0 %1526
    %v1531 = vsel %vm841, %v1485, 0
    %1533 = vmatpush.msra.mxu0 0.0
    %1534 = vmatpush.msra.mxu0 0.0
    %1535 = vmatpush.msra.mxu0 0.0
    %1536 = vmatpush.msra.mxu0 0.0
    %1537 = vmatpush.msra.mxu0 0.0
    %1538 = vmatpush.msra.mxu0 0.0
    %1539 = vmatpush.msra.mxu0 0.0
    %1540 = vmatpush.msra.mxu0 0.0
    %1541 = vmatpush.msra.mxu0 0.0
    %1542 = vmatpush.msra.mxu0 0.0
    %1543 = vmatpush.msra.mxu0 0.0
    %1544 = vmatpush.msra.mxu0 0.0
    %1545 = vmatpush.msra.mxu0 0.0
    %1546 = vmatpush.msra.mxu0 0.0
    %1547 = vmatpush.msra.mxu0 %v1527
    %1548 = vmatpush.msra.mxu0 %v1525
    %1549 = vmatmul.f32.gmra.mxu0 %v1531
    %v1550 = vpop.f32.mrf.mxu0
    %v1551 = vadd.f32 0.0, %v1550
    %1552 = vdwg.mxu0
    %1553 = vrot.lane.b32.xlu0 %v1156, 96
    %v1554 = vpop.permute.xlu0 %1553
    %1555 = vrot.lane.b32.xlu0 %v1157, 96
    %v1556 = vpop.permute.xlu0 %1555
    %v1560 = vsel %vm841, %v1487, 0
    %1562 = vmatpush.msra.mxu0 0.0
    %1563 = vmatpush.msra.mxu0 0.0
    %1564 = vmatpush.msra.mxu0 0.0
    %1565 = vmatpush.msra.mxu0 0.0
    %1566 = vmatpush.msra.mxu0 0.0
    %1567 = vmatpush.msra.mxu0 0.0
    %1568 = vmatpush.msra.mxu0 0.0
    %1569 = vmatpush.msra.mxu0 0.0
    %1570 = vmatpush.msra.mxu0 0.0
    %1571 = vmatpush.msra.mxu0 0.0
    %1572 = vmatpush.msra.mxu0 0.0
    %1573 = vmatpush.msra.mxu0 0.0
    %1574 = vmatpush.msra.mxu0 0.0
    %1575 = vmatpush.msra.mxu0 0.0
    %1576 = vmatpush.msra.mxu0 %v1556
    %1577 = vmatpush.msra.mxu0 %v1554
    %1578 = vmatmul.f32.gmra.mxu0 %v1560
    %v1579 = vpop.f32.mrf.mxu0
    %v1580 = vadd.f32 0.0, %v1579
    %1581 = vdwg.mxu0
    %1582 = vrot.lane.b32.xlu0 %v1205, 96
    %v1583 = vpop.permute.xlu0 %1582
    %1584 = vrot.lane.b32.xlu0 %v1207, 96
    %v1585 = vpop.permute.xlu0 %1584
    %v1589 = vsel %vm841, %v1489, 0
    %1591 = vmatpush.msra.mxu0 0.0
    %1592 = vmatpush.msra.mxu0 0.0
    %1593 = vmatpush.msra.mxu0 0.0
    %1594 = vmatpush.msra.mxu0 0.0
    %1595 = vmatpush.msra.mxu0 0.0
    %1596 = vmatpush.msra.mxu0 0.0
    %1597 = vmatpush.msra.mxu0 0.0
    %1598 = vmatpush.msra.mxu0 0.0
    %1599 = vmatpush.msra.mxu0 0.0
    %1600 = vmatpush.msra.mxu0 0.0
    %1601 = vmatpush.msra.mxu0 0.0
    %1602 = vmatpush.msra.mxu0 0.0
    %1603 = vmatpush.msra.mxu0 0.0
    %1604 = vmatpush.msra.mxu0 0.0
    %1605 = vmatpush.msra.mxu0 %v1585
    %1606 = vmatpush.msra.mxu0 %v1583
    %1607 = vmatmul.f32.gmra.mxu0 %v1589
    %v1608 = vpop.f32.mrf.mxu0
    %v1609 = vadd.f32 0.0, %v1608
    %1610 = vdwg.mxu0
    %1611 = vrot.lane.b32.xlu0 %v1209, 96
    %v1612 = vpop.permute.xlu0 %1611
    %1613 = vrot.lane.b32.xlu0 %v1211, 96
    %v1614 = vpop.permute.xlu0 %1613
    %v1618 = vsel %vm841, %v1491, 0
    %1620 = vmatpush.msra.mxu0 0.0
    %1621 = vmatpush.msra.mxu0 0.0
    %1622 = vmatpush.msra.mxu0 0.0
    %1623 = vmatpush.msra.mxu0 0.0
    %1624 = vmatpush.msra.mxu0 0.0
    %1625 = vmatpush.msra.mxu0 0.0
    %1626 = vmatpush.msra.mxu0 0.0
    %1627 = vmatpush.msra.mxu0 0.0
    %1628 = vmatpush.msra.mxu0 0.0
    %1629 = vmatpush.msra.mxu0 0.0
    %1630 = vmatpush.msra.mxu0 0.0
    %1631 = vmatpush.msra.mxu0 0.0
    %1632 = vmatpush.msra.mxu0 0.0
    %1633 = vmatpush.msra.mxu0 0.0
    %1634 = vmatpush.msra.mxu0 %v1614
    %1635 = vmatpush.msra.mxu0 %v1612
    %1636 = vmatmul.f32.gmra.mxu0 %v1618
    %v1637 = vpop.f32.mrf.mxu0
    %v1638 = vadd.f32 0.0, %v1637
    %1639 = vdwg.mxu0
    %1640 = vrot.lane.b32.xlu0 %v1213, 96
    %v1641 = vpop.permute.xlu0 %1640
    %1642 = vrot.lane.b32.xlu0 %v1215, 96
    %v1643 = vpop.permute.xlu0 %1642
    %v1647 = vsel %vm841, %v1493, 0
    %1649 = vmatpush.msra.mxu0 0.0
    %1650 = vmatpush.msra.mxu0 0.0
    %1651 = vmatpush.msra.mxu0 0.0
    %1652 = vmatpush.msra.mxu0 0.0
    %1653 = vmatpush.msra.mxu0 0.0
    %1654 = vmatpush.msra.mxu0 0.0
    %1655 = vmatpush.msra.mxu0 0.0
    %1656 = vmatpush.msra.mxu0 0.0
    %1657 = vmatpush.msra.mxu0 0.0
    %1658 = vmatpush.msra.mxu0 0.0
    %1659 = vmatpush.msra.mxu0 0.0
    %1660 = vmatpush.msra.mxu0 0.0
    %1661 = vmatpush.msra.mxu0 0.0
    %1662 = vmatpush.msra.mxu0 0.0
    %1663 = vmatpush.msra.mxu0 %v1643
    %1664 = vmatpush.msra.mxu0 %v1641
    %1665 = vmatmul.f32.gmra.mxu0 %v1647
    %v1666 = vpop.f32.mrf.mxu0
    %v1667 = vadd.f32 0.0, %v1666
    %1668 = vdwg.mxu0
    %1669 = vrot.lane.b32.xlu0 %v1217, 96
    %v1670 = vpop.permute.xlu0 %1669
    %1671 = vrot.lane.b32.xlu0 %v1219, 96
    %v1672 = vpop.permute.xlu0 %1671
    %v1676 = vsel %vm841, %v1495, 0
    %1678 = vmatpush.msra.mxu0 0.0
    %1679 = vmatpush.msra.mxu0 0.0
    %1680 = vmatpush.msra.mxu0 0.0
    %1681 = vmatpush.msra.mxu0 0.0
    %1682 = vmatpush.msra.mxu0 0.0
    %1683 = vmatpush.msra.mxu0 0.0
    %1684 = vmatpush.msra.mxu0 0.0
    %1685 = vmatpush.msra.mxu0 0.0
    %1686 = vmatpush.msra.mxu0 0.0
    %1687 = vmatpush.msra.mxu0 0.0
    %1688 = vmatpush.msra.mxu0 0.0
    %1689 = vmatpush.msra.mxu0 0.0
    %1690 = vmatpush.msra.mxu0 0.0
    %1691 = vmatpush.msra.mxu0 0.0
    %1692 = vmatpush.msra.mxu0 %v1672
    %1693 = vmatpush.msra.mxu0 %v1670
    %1694 = vmatmul.f32.gmra.mxu0 %v1676
    %v1695 = vpop.f32.mrf.mxu0
    %v1696 = vadd.f32 0.0, %v1695
    %1697 = vdwg.mxu0
    %1698 = vrot.lane.b32.xlu0 %v1221, 96
    %v1699 = vpop.permute.xlu0 %1698
    %1700 = vrot.lane.b32.xlu0 %v1223, 96
    %v1701 = vpop.permute.xlu0 %1700
    %v1705 = vsel %vm841, %v1497, 0
    %1707 = vmatpush.msra.mxu0 0.0
    %1708 = vmatpush.msra.mxu0 0.0
    %1709 = vmatpush.msra.mxu0 0.0
    %1710 = vmatpush.msra.mxu0 0.0
    %1711 = vmatpush.msra.mxu0 0.0
    %1712 = vmatpush.msra.mxu0 0.0
    %1713 = vmatpush.msra.mxu0 0.0
    %1714 = vmatpush.msra.mxu0 0.0
    %1715 = vmatpush.msra.mxu0 0.0
    %1716 = vmatpush.msra.mxu0 0.0
    %1717 = vmatpush.msra.mxu0 0.0
    %1718 = vmatpush.msra.mxu0 0.0
    %1719 = vmatpush.msra.mxu0 0.0
    %1720 = vmatpush.msra.mxu0 0.0
    %1721 = vmatpush.msra.mxu0 %v1701
    %1722 = vmatpush.msra.mxu0 %v1699
    %1723 = vmatmul.f32.gmra.mxu0 %v1705
    %v1724 = vpop.f32.mrf.mxu0
    %v1725 = vadd.f32 0.0, %v1724
    %1726 = vdwg.mxu0
    %1727 = vrot.lane.b32.xlu0 %v1225, 96
    %v1728 = vpop.permute.xlu0 %1727
    %1729 = vrot.lane.b32.xlu0 %v1227, 96
    %v1730 = vpop.permute.xlu0 %1729
    %v1734 = vsel %vm841, %v1499, 0
    %1736 = vmatpush.msra.mxu0 0.0
    %1737 = vmatpush.msra.mxu0 0.0
    %1738 = vmatpush.msra.mxu0 0.0
    %1739 = vmatpush.msra.mxu0 0.0
    %1740 = vmatpush.msra.mxu0 0.0
    %1741 = vmatpush.msra.mxu0 0.0
    %1742 = vmatpush.msra.mxu0 0.0
    %1743 = vmatpush.msra.mxu0 0.0
    %1744 = vmatpush.msra.mxu0 0.0
    %1745 = vmatpush.msra.mxu0 0.0
    %1746 = vmatpush.msra.mxu0 0.0
    %1747 = vmatpush.msra.mxu0 0.0
    %1748 = vmatpush.msra.mxu0 0.0
    %1749 = vmatpush.msra.mxu0 0.0
    %1750 = vmatpush.msra.mxu0 %v1730
    %1751 = vmatpush.msra.mxu0 %v1728
    %1752 = vmatmul.f32.gmra.mxu0 %v1734
    %v1753 = vpop.f32.mrf.mxu0
    %v1754 = vadd.f32 0.0, %v1753
    %1755 = vdwg.mxu0
    %v1756 = vrcp.pop %v1502
    %v1757 = vmul.f32 %v1502, %v1756
    %v1758 = vsub.f32 1.0, %v1757
    %v1759 = vmul.f32 %v1756, %v1758
    %v1760 = vadd.f32 %v1756, %v1759
    %vm1761 = vweird.f32 %v1502
    %vm1762 = vweird.f32 %v1756
    %vm1763 = vmor %vm1761, %vm1762
    %v1764 = vsel %vm1763, %v1756, %v1760
    %v1765 = vand.u32 2147483647, %v1502
    %vm1766 = vcmp.eq.f32.partialorder %v1765, 8.507059e+37
    %v1767 = vand.u32 %v1502, 2147483648
    %v1768 = vor.u32 1.1754944e-38, %v1767
    %v1769 = vsel %vm1766, %v1768, %v1764
    %v1770 = vmul.f32 1.0, %v1769
    %v1771 = vrcp.pop %v1505
    %v1772 = vmul.f32 %v1505, %v1771
    %v1773 = vsub.f32 1.0, %v1772
    %v1774 = vmul.f32 %v1771, %v1773
    %v1775 = vadd.f32 %v1771, %v1774
    %vm1776 = vweird.f32 %v1505
    %vm1777 = vweird.f32 %v1771
    %vm1778 = vmor %vm1776, %vm1777
    %v1779 = vsel %vm1778, %v1771, %v1775
    %v1780 = vand.u32 2147483647, %v1505
    %vm1781 = vcmp.eq.f32.partialorder %v1780, 8.507059e+37
    %v1782 = vand.u32 %v1505, 2147483648
    %v1783 = vor.u32 1.1754944e-38, %v1782
    %v1784 = vsel %vm1781, %v1783, %v1779
    %v1785 = vmul.f32 1.0, %v1784
    %v1786 = vrcp.pop %v1508
    %v1787 = vmul.f32 %v1508, %v1786
    %v1788 = vsub.f32 1.0, %v1787
    %v1789 = vmul.f32 %v1786, %v1788
    %v1790 = vadd.f32 %v1786, %v1789
    %vm1791 = vweird.f32 %v1508
    %vm1792 = vweird.f32 %v1786
    %vm1793 = vmor %vm1791, %vm1792
    %v1794 = vsel %vm1793, %v1786, %v1790
    %v1795 = vand.u32 2147483647, %v1508
    %vm1796 = vcmp.eq.f32.partialorder %v1795, 8.507059e+37
    %v1797 = vand.u32 %v1508, 2147483648
    %v1798 = vor.u32 1.1754944e-38, %v1797
    %v1799 = vsel %vm1796, %v1798, %v1794
    %v1800 = vmul.f32 1.0, %v1799
    %v1801 = vrcp.pop %v1511
    %v1802 = vmul.f32 %v1511, %v1801
    %v1803 = vsub.f32 1.0, %v1802
    %v1804 = vmul.f32 %v1801, %v1803
    %v1805 = vadd.f32 %v1801, %v1804
    %vm1806 = vweird.f32 %v1511
    %vm1807 = vweird.f32 %v1801
    %vm1808 = vmor %vm1806, %vm1807
    %v1809 = vsel %vm1808, %v1801, %v1805
    %v1810 = vand.u32 2147483647, %v1511
    %vm1811 = vcmp.eq.f32.partialorder %v1810, 8.507059e+37
    %v1812 = vand.u32 %v1511, 2147483648
    %v1813 = vor.u32 1.1754944e-38, %v1812
    %v1814 = vsel %vm1811, %v1813, %v1809
    %v1815 = vmul.f32 1.0, %v1814
    %v1816 = vrcp.pop %v1514
    %v1817 = vmul.f32 %v1514, %v1816
    %v1818 = vsub.f32 1.0, %v1817
    %v1819 = vmul.f32 %v1816, %v1818
    %v1820 = vadd.f32 %v1816, %v1819
    %vm1821 = vweird.f32 %v1514
    %vm1822 = vweird.f32 %v1816
    %vm1823 = vmor %vm1821, %vm1822
    %v1824 = vsel %vm1823, %v1816, %v1820
    %v1825 = vand.u32 2147483647, %v1514
    %vm1826 = vcmp.eq.f32.partialorder %v1825, 8.507059e+37
    %v1827 = vand.u32 %v1514, 2147483648
    %v1828 = vor.u32 1.1754944e-38, %v1827
    %v1829 = vsel %vm1826, %v1828, %v1824
    %v1830 = vmul.f32 1.0, %v1829
    %v1831 = vrcp.pop %v1517
    %v1832 = vmul.f32 %v1517, %v1831
    %v1833 = vsub.f32 1.0, %v1832
    %v1834 = vmul.f32 %v1831, %v1833
    %v1835 = vadd.f32 %v1831, %v1834
    %vm1836 = vweird.f32 %v1517
    %vm1837 = vweird.f32 %v1831
    %vm1838 = vmor %vm1836, %vm1837
    %v1839 = vsel %vm1838, %v1831, %v1835
    %v1840 = vand.u32 2147483647, %v1517
    %vm1841 = vcmp.eq.f32.partialorder %v1840, 8.507059e+37
    %v1842 = vand.u32 %v1517, 2147483648
    %v1843 = vor.u32 1.1754944e-38, %v1842
    %v1844 = vsel %vm1841, %v1843, %v1839
    %v1845 = vmul.f32 1.0, %v1844
    %v1846 = vrcp.pop %v1520
    %v1847 = vmul.f32 %v1520, %v1846
    %v1848 = vsub.f32 1.0, %v1847
    %v1849 = vmul.f32 %v1846, %v1848
    %v1850 = vadd.f32 %v1846, %v1849
    %vm1851 = vweird.f32 %v1520
    %vm1852 = vweird.f32 %v1846
    %vm1853 = vmor %vm1851, %vm1852
    %v1854 = vsel %vm1853, %v1846, %v1850
    %v1855 = vand.u32 2147483647, %v1520
    %vm1856 = vcmp.eq.f32.partialorder %v1855, 8.507059e+37
    %v1857 = vand.u32 %v1520, 2147483648
    %v1858 = vor.u32 1.1754944e-38, %v1857
    %v1859 = vsel %vm1856, %v1858, %v1854
    %v1860 = vmul.f32 1.0, %v1859
    %v1861 = vrcp.pop %v1523
    %v1862 = vmul.f32 %v1523, %v1861
    %v1863 = vsub.f32 1.0, %v1862
    %v1864 = vmul.f32 %v1861, %v1863
    %v1865 = vadd.f32 %v1861, %v1864
    %vm1866 = vweird.f32 %v1523
    %vm1867 = vweird.f32 %v1861
    %vm1868 = vmor %vm1866, %vm1867
    %v1869 = vsel %vm1868, %v1861, %v1865
    %v1870 = vand.u32 2147483647, %v1523
    %vm1871 = vcmp.eq.f32.partialorder %v1870, 8.507059e+37
    %v1872 = vand.u32 %v1523, 2147483648
    %v1873 = vor.u32 1.1754944e-38, %v1872
    %v1874 = vsel %vm1871, %v1873, %v1869
    %v1875 = vmul.f32 1.0, %v1874
    %v1876 = vmul.f32 %v1551, %v1770
    %v1877 = vmul.f32 %v1580, %v1785
    %v1878 = vmul.f32 %v1609, %v1800
    %v1879 = vmul.f32 %v1638, %v1815
    %v1880 = vmul.f32 %v1667, %v1830
    %v1881 = vmul.f32 %v1696, %v1845
    %v1882 = vmul.f32 %v1725, %v1860
    %v1883 = vmul.f32 %v1754, %v1875
    %1886 = vrot.lane.b32.xlu0 %v1878, 8
    %v1887 = vpop.permute.xlu0 %1886
    %1888 = vrot.lane.b32.xlu0 %v1879, 8
    %v1889 = vpop.permute.xlu0 %1888
    %1894 = vrot.lane.b32.xlu0 %v1880, 16
    %v1895 = vpop.permute.xlu0 %1894
    %1896 = vrot.lane.b32.xlu0 %v1881, 16
    %v1897 = vpop.permute.xlu0 %1896
    %1902 = vrot.lane.b32.xlu0 %v1882, 24
    %v1903 = vpop.permute.xlu0 %1902
    %1904 = vrot.lane.b32.xlu0 %v1883, 24
    %v1905 = vpop.permute.xlu0 %1904
    %v1908 = vsel %vm200, %v1876, %v1887
    %v1909 = vsel %vm200, %v1877, %v1889
    %v1910 = vsel %vm841, %v1908, %v1895
    %v1911 = vsel %vm841, %v1909, %v1897
    %v1912 = vsel %vm844, %v1910, %v1903
    %v1913 = vsel %vm844, %v1911, %v1905
    %v1915 = vsel %vm107, %v1912, 0
    %v1918 = vsel %vm107, %v1913, 0
    %1920 = vmatpush.msra.mxu0 0.0
    %1921 = vmatpush.msra.mxu0 0.0
    %1922 = vmatpush.msra.mxu0 0.0
    %1923 = vmatpush.msra.mxu0 0.0
    %1924 = vmatpush.msra.mxu0 0.0
    %1925 = vmatpush.msra.mxu0 0.0
    %1926 = vmatpush.msra.mxu0 0.0
    %1927 = vmatpush.msra.mxu0 0.0
    %1928 = vmatpush.msra.mxu0 0.0
    %1929 = vmatpush.msra.mxu0 0.0
    %1930 = vmatpush.msra.mxu0 0.0
    %1931 = vmatpush.msra.mxu0 0.0
    %1932 = vmatpush.msra.mxu0 %v78
    %1933 = vmatpush.msra.mxu0 %v76
    %1934 = vmatpush.msra.mxu0 %v74
    %1935 = vmatpush.msra.mxu0 %v72
    %1936 = vmatmul.f32.gmra.mxu0 %v1915
    %v1937 = vpop.f32.mrf.mxu0
    %v1938 = vadd.f32 0.0, %v1937
    %1939 = vmatmul.f32.gmra.mxu0 %v1918
    %v1940 = vpop.f32.mrf.mxu0
    %v1941 = vadd.f32 0.0, %v1940
    %1942 = vdwg.mxu0
    %v1943 = vperm.slane %v103, 7
    %1945 = vrot.lane.b32.xlu0 %v1943, 96
    %v1946 = vpop.permute.xlu0 %1945
    %v1948 = vadd.f32 %v1938, %v1946
    %v1949 = vadd.f32 %v1941, %v1946
    %1952 = vrot.lane.b32.xlu0 %v1948, 32
    %v1953 = vpop.permute.xlu0 %1952
    %1954 = vrot.lane.b32.xlu0 %v1949, 32
    %v1955 = vpop.permute.xlu0 %1954
    %v1958 = vadd.f32 %v1063, %v1953
    %v1959 = vadd.f32 %v1064, %v1955
    %v1960 = vsel %vm107, %v1958, 0.0
    %1961 = vadd.xlane.f32.xlu0 %v1960
    %v1962 = vpop.xlane.xlu0 %1961
    %v1963 = vsel %vm107, %v1959, 0.0
    %1964 = vadd.xlane.f32.xlu0 %v1963
    %v1965 = vpop.xlane.xlu0 %1964
    %v1966 = vmul.f32 %v1962, %v905
    %v1967 = vmul.f32 %v1965, %v905
    %v1968 = vsub.f32 %v1958, %v1966
    %v1969 = vsub.f32 %v1959, %v1967
    %v1970 = vmul.f32 %v1968, %v1968
    %v1971 = vmul.f32 %v1969, %v1969
    %v1972 = vsel %vm107, %v1970, 0.0
    %1973 = vadd.xlane.f32.xlu0 %v1972
    %v1974 = vpop.xlane.xlu0 %1973
    %v1975 = vsel %vm107, %v1971, 0.0
    %1976 = vadd.xlane.f32.xlu0 %v1975
    %v1977 = vpop.xlane.xlu0 %1976
    %v1978 = vmul.f32 %v1974, %v905
    %v1979 = vmul.f32 %v1977, %v905
    %v1980 = vadd.f32 %v1978, 1e-05
    %v1981 = vadd.f32 %v1979, 1e-05
    %v1982 = vrsqrt.pop %v1980
    %v1983 = vmul.f32 %v1982, %v1980
    %v1984 = vmul.f32 %v1983, %v1982
    %v1985 = vmul.f32 0.5, %v1984
    %v1986 = vsub.f32 1.5, %v1985
    %v1987 = vmul.f32 %v1982, %v1986
    %vm1988 = vweird.f32 %v1980
    %vm1989 = vweird.f32 %v1982
    %vm1990 = vmor %vm1988, %vm1989
    %v1991 = vsel %vm1990, %v1982, %v1987
    %v1992 = vrsqrt.pop %v1981
    %v1993 = vmul.f32 %v1992, %v1981
    %v1994 = vmul.f32 %v1993, %v1992
    %v1995 = vmul.f32 0.5, %v1994
    %v1996 = vsub.f32 1.5, %v1995
    %v1997 = vmul.f32 %v1992, %v1996
    %vm1998 = vweird.f32 %v1981
    %vm1999 = vweird.f32 %v1992
    %vm2000 = vmor %vm1998, %vm1999
    %v2001 = vsel %vm2000, %v1992, %v1997
    %v2002 = vmul.f32 %v1968, %v1991
    %v2003 = vmul.f32 %v1969, %v2001
    %v2004 = vperm.slane %v104, 6
    %v2005 = vmul.f32 %v2002, %v2004
    %v2006 = vmul.f32 %v2003, %v2004
    %v2007 = vperm.slane %v104, 7
    %v2008 = vadd.f32 %v2005, %v2007
    %v2009 = vadd.f32 %v2006, %v2007
    %v2010 = vperm.slane %v106, 1
    %v2012 = vsel %vm107, %v2008, 0
    %v2015 = vsel %vm107, %v2009, 0
    %2017 = vmatpush.msra.mxu0 0.0
    %2018 = vmatpush.msra.mxu0 0.0
    %2019 = vmatpush.msra.mxu0 0.0
    %2020 = vmatpush.msra.mxu0 0.0
    %2021 = vmatpush.msra.mxu0 0.0
    %2022 = vmatpush.msra.mxu0 0.0
    %2023 = vmatpush.msra.mxu0 0.0
    %2024 = vmatpush.msra.mxu0 0.0
    %2025 = vmatpush.msra.mxu0 0.0
    %2026 = vmatpush.msra.mxu0 0.0
    %2027 = vmatpush.msra.mxu0 0.0
    %2028 = vmatpush.msra.mxu0 0.0
    %2029 = vmatpush.msra.mxu0 %v86
    %2030 = vmatpush.msra.mxu0 %v85
    %2031 = vmatpush.msra.mxu0 %v84
    %2032 = vmatpush.msra.mxu0 %v83
    %2033 = vmatmul.f32.gmra.mxu0 %v2012
    %v2034 = vpop.f32.mrf.mxu0
    %v2035 = vadd.f32 %v2010, %v2034
    %2036 = vmatmul.f32.gmra.mxu0 %v2015
    %v2037 = vpop.f32.mrf.mxu0
    %v2038 = vadd.f32 %v2010, %v2037
    %2039 = vdwg.mxu0
    %v2040 = vmax.f32 %v2035, 0.0
    %v2041 = vmax.f32 %v2038, 0.0
    %v2042 = vperm.slane %v104, 1
    %v2044 = vsel %vm983, %v2040, 0
    %v2047 = vsel %vm983, %v2041, 0
    %2049 = vmatpush.msra.mxu0 0.0
    %2050 = vmatpush.msra.mxu0 0.0
    %2051 = vmatpush.msra.mxu0 0.0
    %2052 = vmatpush.msra.mxu0 0.0
    %2053 = vmatpush.msra.mxu0 0.0
    %2054 = vmatpush.msra.mxu0 0.0
    %2055 = vmatpush.msra.mxu0 0.0
    %2056 = vmatpush.msra.mxu0 0.0
    %2057 = vmatpush.msra.mxu0 %v102
    %2058 = vmatpush.msra.mxu0 %v101
    %2059 = vmatpush.msra.mxu0 %v100
    %2060 = vmatpush.msra.mxu0 %v99
    %2061 = vmatpush.msra.mxu0 %v98
    %2062 = vmatpush.msra.mxu0 %v97
    %2063 = vmatpush.msra.mxu0 %v96
    %2064 = vmatpush.msra.mxu0 %v95
    %2065 = vmatmul.f32.gmra.mxu0 %v2044
    %v2066 = vpop.f32.mrf.mxu0
    %v2067 = vadd.f32 %v2042, %v2066
    %2068 = vmatmul.f32.gmra.mxu0 %v2047
    %v2069 = vpop.f32.mrf.mxu0
    %v2070 = vadd.f32 %v2042, %v2069
    %2071 = vdwg.mxu0
    %v2072 = vadd.f32 %v2008, %v2067
    %v2073 = vadd.f32 %v2009, %v2070
    %v2074 = vsel %vm107, %v2072, 0.0
    %2075 = vadd.xlane.f32.xlu0 %v2074
    %v2076 = vpop.xlane.xlu0 %2075
    %v2077 = vsel %vm107, %v2073, 0.0
    %2078 = vadd.xlane.f32.xlu0 %v2077
    %v2079 = vpop.xlane.xlu0 %2078
    %v2080 = vmul.f32 %v2076, %v905
    %v2081 = vmul.f32 %v2079, %v905
    %v2082 = vsub.f32 %v2072, %v2080
    %v2083 = vsub.f32 %v2073, %v2081
    %v2084 = vmul.f32 %v2082, %v2082
    %v2085 = vmul.f32 %v2083, %v2083
    %v2086 = vsel %vm107, %v2084, 0.0
    %2087 = vadd.xlane.f32.xlu0 %v2086
    %v2088 = vpop.xlane.xlu0 %2087
    %v2089 = vsel %vm107, %v2085, 0.0
    %2090 = vadd.xlane.f32.xlu0 %v2089
    %v2091 = vpop.xlane.xlu0 %2090
    %v2092 = vmul.f32 %v2088, %v905
    %v2093 = vmul.f32 %v2091, %v905
    %v2094 = vadd.f32 %v2092, 1e-05
    %v2095 = vadd.f32 %v2093, 1e-05
    %v2096 = vrsqrt.pop %v2094
    %v2097 = vmul.f32 %v2096, %v2094
    %v2098 = vmul.f32 %v2097, %v2096
    %v2099 = vmul.f32 0.5, %v2098
    %v2100 = vsub.f32 1.5, %v2099
    %v2101 = vmul.f32 %v2096, %v2100
    %vm2102 = vweird.f32 %v2094
    %vm2103 = vweird.f32 %v2096
    %vm2104 = vmor %vm2102, %vm2103
    %v2105 = vsel %vm2104, %v2096, %v2101
    %v2106 = vrsqrt.pop %v2095
    %v2107 = vmul.f32 %v2106, %v2095
    %v2108 = vmul.f32 %v2107, %v2106
    %v2109 = vmul.f32 0.5, %v2108
    %v2110 = vsub.f32 1.5, %v2109
    %v2111 = vmul.f32 %v2106, %v2110
    %vm2112 = vweird.f32 %v2095
    %vm2113 = vweird.f32 %v2106
    %vm2114 = vmor %vm2112, %vm2113
    %v2115 = vsel %vm2114, %v2106, %v2111
    %v2116 = vmul.f32 %v2082, %v2105
    %v2117 = vmul.f32 %v2083, %v2115
    %v2118 = vperm.slane %v105, 0
    %v2119 = vmul.f32 %v2116, %v2118
    %v2120 = vmul.f32 %v2117, %v2118
    %v2121 = vperm.slane %v105, 1
    %v2122 = vadd.f32 %v2119, %v2121
    %v2123 = vadd.f32 %v2120, %v2121
    %2124 = vst.msk [vmem:[#allocation7] sm:$0xff] %vm107, %v2122
    %2125 = vst.msk [vmem:[#allocation7 + $0x8] sm:$0xff] %vm107, %v2123
    // Predicated region
    $region46: #{tpu_custom_call.1} parent=1 // pred_check
      _
    $region47: #{tpu_custom_call.1} parent=1 // pred_check_branch
      %2127 = sbr.rel (0) target = $region49
    $region48: #{tpu_custom_call.1} parent=1 // pred_region
      %2129 = vsyncadd [#allocation4], 0
      %s2130 = sshll.u32 [#allocation7], 4
      %s2131 = int_to_ptr.vmem [resolvable:$true] %s2130
      %s2132 = sshll.u32 %s9, 4
      %s2133 = int_to_ptr.hbm [resolvable:$true] %s2132
      %2138 = dma.vmem_to_hbm [thread:$0]  %s2131, 256, %s2133, [#allocation4], 128, 128, 8
    $region49: #{tpu_custom_call.1} parent=1 // pred_fallthru
      _
    // Predicated region
    $region50: #{tpu_custom_call.1} parent=1 // pred_check
      _
    $region51: #{tpu_custom_call.1} parent=1 // pred_check_branch
      %2140 = sbr.rel (0) target = $region53
    $region52: #{tpu_custom_call.1} parent=1 // pred_region
      %2142 = dma.done [#allocation4], 256
    $region53: #{tpu_custom_call.1} parent=1 // pred_fallthru
      _
    %2143 = vsyncpa [#allocation3], 1
    %2144 = vsyncpa [#allocation6], 1
    %2145 = vsyncpa [#allocation4], 1

</llo_original>
